<compile_context>
chip_gen: v7x
topology: tpu7x:2x2x1
jax: 0.10.0
libtpu: 0.0.40
codegen_flags: <defaults>
</compile_context>

<pallas_src>
import math

import jax
import jax.numpy as jnp
from jax.experimental import pallas as pl
from jax.experimental.pallas import tpu as pltpu

NUM_HEADS = 4


def modified_decoder_layer(x, params, *, compute_dtype=jnp.float32, batch_block=None):
    """x: (B, S, D) float32. params: dict of weights + task_vector (see __main__)."""
    B, S, D = x.shape
    H = NUM_HEADS
    Dh = D // H
    Dff = params["w1"].shape[1]

    Bb = B if batch_block is None else batch_block
    assert B % Bb == 0, "batch must be divisible by batch_block"
    N = Bb * S  # rows presented to the MXU per grid step

    # ---- wrapper-side weight packing (feedback items 2, 4, 7a) ----
    scale = 1.0 / math.sqrt(Dh)
    wqkv = jnp.concatenate(
        [params["wq"] * scale, params["wk"], params["wv"]], axis=1
    ).astype(compute_dtype)                              # (D, 3D), scale folded into Q
    wo = params["wo"].astype(compute_dtype)
    w1 = params["w1"].astype(compute_dtype)
    w2 = params["w2"].astype(compute_dtype)

    def kernel(x_ref, wqkv_ref, wo_ref, w1_ref, w2_ref,
               g1_ref, b1_ref, g2_ref, b2_ref, tv_ref, o_ref):
        # ---- flatten batch block into the matmul M dimension ----
        x_f32 = x_ref[...].reshape(N, D).astype(jnp.float32)          # (N, D)

        # ---- LayerNorm 1 (f32) ----
        mu = jnp.mean(x_f32, axis=-1, keepdims=True)
        var = jnp.mean(jnp.square(x_f32 - mu), axis=-1, keepdims=True)
        xn = (x_f32 - mu) * jax.lax.rsqrt(var + 1e-5) * g1_ref[...] + b1_ref[...]

        # ---- fused QKV projection: one (N,D)x(D,3D) matmul ----
        qkv = jnp.dot(xn.astype(compute_dtype), wqkv_ref[...],
                      preferred_element_type=jnp.float32)             # (N, 3D) f32
        qkv3 = qkv.reshape(Bb, S, 3 * D)

        # ---- head-batched causal attention: merge (head, batch) into one batch axis ----
        q_h = jnp.concatenate(
            [qkv3[:, :, h * Dh:(h + 1) * Dh] for h in range(H)], axis=0)          # (H*Bb, S, Dh)
        k_h = jnp.concatenate(
            [qkv3[:, :, D + h * Dh:D + (h + 1) * Dh] for h in range(H)], axis=0)  # (H*Bb, S, Dh)
        v_h = jnp.concatenate(
            [qkv3[:, :, 2 * D + h * Dh:2 * D + (h + 1) * Dh] for h in range(H)], axis=0)

        s = jnp.einsum("nqd,nkd->nqk",
                       q_h.astype(compute_dtype), k_h.astype(compute_dtype),
                       preferred_element_type=jnp.float32)            # (H*Bb, S, S) f32

        row = jax.lax.broadcasted_iota(jnp.int32, (S, S), 0)
        col = jax.lax.broadcasted_iota(jnp.int32, (S, S), 1)
        s = jnp.where((row >= col)[None], s, -1e30)                   # causal mask, f32

        m = jnp.max(s, axis=-1, keepdims=True)
        p = jnp.exp(s - m)
        l = jnp.sum(p, axis=-1, keepdims=True)
        p = p * pl.reciprocal(l, approx=True)                         # EUP slot, VPU stays free

        o = jnp.einsum("nqk,nkd->nqd",
                       p.astype(compute_dtype), v_h.astype(compute_dtype),
                       preferred_element_type=jnp.float32)            # (H*Bb, S, Dh) f32

        attn = jnp.concatenate([o[h * Bb:(h + 1) * Bb] for h in range(H)],
                               axis=-1).reshape(N, D)                  # (N, D)
        attn = jnp.dot(attn.astype(compute_dtype), wo_ref[...],
                       preferred_element_type=jnp.float32)

        h1 = x_f32 + attn                                              # residual 1 (f32)

        # ---- LayerNorm 2 (f32) ----
        mu2 = jnp.mean(h1, axis=-1, keepdims=True)
        var2 = jnp.mean(jnp.square(h1 - mu2), axis=-1, keepdims=True)
        hn = (h1 - mu2) * jax.lax.rsqrt(var2 + 1e-5) * g2_ref[...] + b2_ref[...]

        # ---- MLP ----
        m1 = jnp.dot(hn.astype(compute_dtype), w1_ref[...],
                     preferred_element_type=jnp.float32)               # (N, Dff)
        m1 = jax.nn.gelu(m1, approximate=True)                         # tanh-approx GELU
        m2 = jnp.dot(m1.astype(compute_dtype), w2_ref[...],
                     preferred_element_type=jnp.float32)               # (N, D)

        out3 = (h1 + m2).reshape(Bb, S, D)                             # residual 2 (f32)

        # ---- store + edit_fn: hidden_states[:, -1, :] += task_vector (targeted row) ----
        o_ref[...] = out3.astype(o_ref.dtype)
        o_ref[:, S - 1:S, :] = (out3[:, S - 1:S, :] + tv_ref[...][None]).astype(o_ref.dtype)

    def rep_spec(shape):
        # full-size, grid-invariant block (weights / LN params / task vector)
        return pl.BlockSpec(shape, lambda b: (0,) * len(shape))

    in_specs = [
        pl.BlockSpec((Bb, S, D), lambda b: (b, 0, 0)),   # x (batch block)
        rep_spec((D, 3 * D)),                            # fused wqkv
        rep_spec((D, D)),                                # wo
        rep_spec((D, Dff)),                              # w1
        rep_spec((Dff, D)),                              # w2
        rep_spec((1, D)),                                # ln1 gamma
        rep_spec((1, D)),                                # ln1 beta
        rep_spec((1, D)),                                # ln2 gamma
        rep_spec((1, D)),                                # ln2 beta
        rep_spec((1, D)),                                # task_vector
    ]

    return pl.pallas_call(
        kernel,
        out_shape=jax.ShapeDtypeStruct((B, S, D), jnp.float32),
        grid_spec=pltpu.PrefetchScalarGridSpec(
            num_scalar_prefetch=0,
            grid=(B // Bb,),
            in_specs=in_specs,
            out_specs=pl.BlockSpec((Bb, S, D), lambda b: (b, 0, 0)),
        ),
        compiler_params=pltpu.CompilerParams(
            dimension_semantics=("parallel",)),
    )(x, wqkv, wo, w1, w2,
      params["g1"], params["b1"], params["g2"], params["b2"],
      params["task_vector"])


def _ref_forward(x, p):
    """Pure-JAX f32 reference of the same decoder layer + edit_fn."""
    B, S, D = x.shape
    H, Dh = NUM_HEADS, D // NUM_HEADS

    def ln(z, g, b):
        mu = jnp.mean(z, -1, keepdims=True)
        var = jnp.mean(jnp.square(z - mu), -1, keepdims=True)
        return (z - mu) * jax.lax.rsqrt(var + 1e-5) * g + b

    xn = ln(x, p["g1"], p["b1"])
    q = xn @ p["wq"]; k = xn @ p["wk"]; v = xn @ p["wv"]
    q = q.reshape(B, S, H, Dh).transpose(0, 2, 1, 3)
    k = k.reshape(B, S, H, Dh).transpose(0, 2, 1, 3)
    v = v.reshape(B, S, H, Dh).transpose(0, 2, 1, 3)
    s = jnp.einsum("bhqd,bhkd->bhqk", q, k) / math.sqrt(Dh)
    mask = jnp.tril(jnp.ones((S, S), bool))
    s = jnp.where(mask, s, -1e30)
    pattn = jax.nn.softmax(s, axis=-1)
    attn = jnp.einsum("bhqk,bhkd->bhqd", pattn, v).transpose(0, 2, 1, 3).reshape(B, S, D)
    h1 = x + attn @ p["wo"]
    hn = ln(h1, p["g2"], p["b2"])
    # NOTE: tanh-approx GELU (PyTorch nn.GELU() default is exact erf; kernel & ref match each other).
    mlp = jax.nn.gelu(hn @ p["w1"], approximate=True) @ p["w2"]
    out = h1 + mlp
    out = out.at[:, -1, :].add(p["task_vector"][0])      # edit_fn
    return out


if __name__ == "__main__":
    B, S, D = 2, 8, 32
    Dff = 4 * D

    key = jax.random.PRNGKey(0)
    ks = jax.random.split(key, 8)
    w_scale = 0.02
    params = {
        "wq": w_scale * jax.random.normal(ks[0], (D, D), jnp.float32),
        "wk": w_scale * jax.random.normal(ks[1], (D, D), jnp.float32),
        "wv": w_scale * jax.random.normal(ks[2], (D, D), jnp.float32),
        "wo": w_scale * jax.random.normal(ks[3], (D, D), jnp.float32),
        "w1": w_scale * jax.random.normal(ks[4], (D, Dff), jnp.float32),
        "w2": w_scale * jax.random.normal(ks[5], (Dff, D), jnp.float32),
        "g1": jnp.ones((1, D), jnp.float32),
        "b1": jnp.zeros((1, D), jnp.float32),
        "g2": jnp.ones((1, D), jnp.float32),
        "b2": jnp.zeros((1, D), jnp.float32),
        "task_vector": jax.random.normal(ks[6], (1, D), jnp.float32),
    }
    x = jax.random.normal(ks[7], (B, S, D), jnp.float32)

    ref = _ref_forward(x, params)

    # f32 path (tight check; only deviation from ref is the approx softmax reciprocal).
    out_f32 = jax.block_until_ready(
        modified_decoder_layer(x, params, compute_dtype=jnp.float32))
    assert out_f32.shape == (B, S, D)
    assert jnp.allclose(out_f32, ref, rtol=1e-3, atol=1e-3), "f32 kernel mismatch vs reference"

    # bf16-matmul path (v6e/v7x perf configuration; LN/softmax/residuals stay f32).
    out_bf16 = jax.block_until_ready(
        modified_decoder_layer(x, params, compute_dtype=jnp.bfloat16))
    assert out_bf16.shape == (B, S, D)
    assert out_bf16.dtype == jnp.float32
    assert jnp.allclose(out_bf16, ref, rtol=5e-3, atol=5e-3), "bf16 kernel mismatch vs reference"

    print("KERNEL_OK")
</pallas_src>

<mosaic_0001>
module attributes {stable_mosaic.version = 11 : i64} {
  func.func @kernel(%arg0: i32, %arg1: memref<2x8x32xf32, #tpu.memory_space<vmem>>, %arg2: memref<32x96xf32, #tpu.memory_space<vmem>>, %arg3: memref<32x32xf32, #tpu.memory_space<vmem>>, %arg4: memref<32x128xf32, #tpu.memory_space<vmem>>, %arg5: memref<128x32xf32, #tpu.memory_space<vmem>>, %arg6: memref<1x32xf32, #tpu.memory_space<vmem>>, %arg7: memref<1x32xf32, #tpu.memory_space<vmem>>, %arg8: memref<1x32xf32, #tpu.memory_space<vmem>>, %arg9: memref<1x32xf32, #tpu.memory_space<vmem>>, %arg10: memref<1x32xf32, #tpu.memory_space<vmem>>, %arg11: memref<2x8x32xf32, #tpu.memory_space<vmem>>) attributes {dimension_semantics = [#tpu.dimension_semantics<parallel>], iteration_bounds = array<i64: 1>, scalar_prefetch = 0 : i64, scratch_operands = 0 : i64, tpu.core_type = #tpu.core_type<tc>, window_params = [{transform_indices = @transform_0, window_bounds = array<i64: 2, 8, 32>}, {pipeline_mode = #tpu.pipeline_mode<synchronous>, transform_indices = @transform_1, window_bounds = array<i64: 32, 96>}, {pipeline_mode = #tpu.pipeline_mode<synchronous>, transform_indices = @transform_2, window_bounds = array<i64: 32, 32>}, {pipeline_mode = #tpu.pipeline_mode<synchronous>, transform_indices = @transform_3, window_bounds = array<i64: 32, 128>}, {pipeline_mode = #tpu.pipeline_mode<synchronous>, transform_indices = @transform_4, window_bounds = array<i64: 128, 32>}, {pipeline_mode = #tpu.pipeline_mode<synchronous>, transform_indices = @transform_5, window_bounds = array<i64: 1, 32>}, {pipeline_mode = #tpu.pipeline_mode<synchronous>, transform_indices = @transform_6, window_bounds = array<i64: 1, 32>}, {pipeline_mode = #tpu.pipeline_mode<synchronous>, transform_indices = @transform_7, window_bounds = array<i64: 1, 32>}, {pipeline_mode = #tpu.pipeline_mode<synchronous>, transform_indices = @transform_8, window_bounds = array<i64: 1, 32>}, {pipeline_mode = #tpu.pipeline_mode<synchronous>, transform_indices = @transform_9, window_bounds = array<i64: 1, 32>}, {transform_indices = @transform_10, window_bounds = array<i64: 2, 8, 32>}]} {
    %c0 = arith.constant 0 : index
    %c0_0 = arith.constant 0 : index
    %c0_1 = arith.constant 0 : index
    %0 = vector.load %arg1[%c0, %c0_0, %c0_1] : memref<2x8x32xf32, #tpu.memory_space<vmem>>, vector<2x8x32xf32>
    %1 = vector.shape_cast %0 : vector<2x8x32xf32> to vector<16x32xf32>
    %cst = arith.constant dense<0.000000e+00> : vector<16xf32>
    %2 = vector.multi_reduction <add>, %1, %cst [1] : vector<16x32xf32> to vector<16xf32>
    %3 = vector.shape_cast %2 : vector<16xf32> to vector<16x1xf32>
    %cst_2 = arith.constant 3.200000e+01 : f32
    %4 = vector.broadcast %cst_2 : f32 to vector<16x1xf32>
    %5 = arith.divf %3, %4 : vector<16x1xf32>
    %6 = vector.broadcast %5 : vector<16x1xf32> to vector<16x32xf32>
    %7 = arith.subf %1, %6 : vector<16x32xf32>
    %8 = arith.mulf %7, %7 : vector<16x32xf32>
    %cst_3 = arith.constant dense<0.000000e+00> : vector<16xf32>
    %9 = vector.multi_reduction <add>, %8, %cst_3 [1] : vector<16x32xf32> to vector<16xf32>
    %10 = vector.shape_cast %9 : vector<16xf32> to vector<16x1xf32>
    %cst_4 = arith.constant 3.200000e+01 : f32
    %11 = vector.broadcast %cst_4 : f32 to vector<16x1xf32>
    %12 = arith.divf %10, %11 : vector<16x1xf32>
    %13 = vector.broadcast %5 : vector<16x1xf32> to vector<16x32xf32>
    %14 = arith.subf %1, %13 : vector<16x32xf32>
    %cst_5 = arith.constant 9.99999974E-6 : f32
    %15 = vector.broadcast %cst_5 : f32 to vector<16x1xf32>
    %16 = arith.addf %12, %15 : vector<16x1xf32>
    %17 = math.rsqrt %16 : vector<16x1xf32>
    %18 = vector.broadcast %17 : vector<16x1xf32> to vector<16x32xf32>
    %19 = arith.mulf %14, %18 : vector<16x32xf32>
    %c0_6 = arith.constant 0 : index
    %c0_7 = arith.constant 0 : index
    %20 = vector.load %arg6[%c0_6, %c0_7] : memref<1x32xf32, #tpu.memory_space<vmem>>, vector<1x32xf32>
    %21 = vector.broadcast %20 : vector<1x32xf32> to vector<16x32xf32>
    %22 = arith.mulf %19, %21 : vector<16x32xf32>
    %c0_8 = arith.constant 0 : index
    %c0_9 = arith.constant 0 : index
    %23 = vector.load %arg7[%c0_8, %c0_9] : memref<1x32xf32, #tpu.memory_space<vmem>>, vector<1x32xf32>
    %24 = vector.broadcast %23 : vector<1x32xf32> to vector<16x32xf32>
    %25 = arith.addf %22, %24 : vector<16x32xf32>
    %c0_10 = arith.constant 0 : index
    %c0_11 = arith.constant 0 : index
    %26 = vector.load %arg2[%c0_10, %c0_11] : memref<32x96xf32, #tpu.memory_space<vmem>>, vector<32x96xf32>
    %cst_12 = arith.constant dense<0.000000e+00> : vector<16x96xf32>
    %27 = tpu.matmul %25, %26, %cst_12 {dimension_numbers = #tpu.dot_dimension_numbers<[1], [0], [0], [1], [0, 0, 1, 1], [], []>} : vector<16x32xf32>, vector<32x96xf32>, vector<16x96xf32> -> vector<16x96xf32>
    %28 = vector.shape_cast %27 : vector<16x96xf32> to vector<2x8x96xf32>
    %29 = vector.extract_strided_slice %28 {offsets = [0, 0, 0], sizes = [2, 8, 8], strides = [1, 1, 1]} : vector<2x8x96xf32> to vector<2x8x8xf32>
    %30 = vector.extract_strided_slice %28 {offsets = [0, 0, 8], sizes = [2, 8, 8], strides = [1, 1, 1]} : vector<2x8x96xf32> to vector<2x8x8xf32>
    %31 = vector.extract_strided_slice %28 {offsets = [0, 0, 16], sizes = [2, 8, 8], strides = [1, 1, 1]} : vector<2x8x96xf32> to vector<2x8x8xf32>
    %32 = vector.extract_strided_slice %28 {offsets = [0, 0, 24], sizes = [2, 8, 8], strides = [1, 1, 1]} : vector<2x8x96xf32> to vector<2x8x8xf32>
    %33 = tpu.concatenate %29, %30, %31, %32 in 0 : vector<2x8x8xf32>, vector<2x8x8xf32>, vector<2x8x8xf32>, vector<2x8x8xf32> -> vector<8x8x8xf32>
    %34 = vector.extract_strided_slice %28 {offsets = [0, 0, 32], sizes = [2, 8, 8], strides = [1, 1, 1]} : vector<2x8x96xf32> to vector<2x8x8xf32>
    %35 = vector.extract_strided_slice %28 {offsets = [0, 0, 40], sizes = [2, 8, 8], strides = [1, 1, 1]} : vector<2x8x96xf32> to vector<2x8x8xf32>
    %36 = vector.extract_strided_slice %28 {offsets = [0, 0, 48], sizes = [2, 8, 8], strides = [1, 1, 1]} : vector<2x8x96xf32> to vector<2x8x8xf32>
    %37 = vector.extract_strided_slice %28 {offsets = [0, 0, 56], sizes = [2, 8, 8], strides = [1, 1, 1]} : vector<2x8x96xf32> to vector<2x8x8xf32>
    %38 = tpu.concatenate %34, %35, %36, %37 in 0 : vector<2x8x8xf32>, vector<2x8x8xf32>, vector<2x8x8xf32>, vector<2x8x8xf32> -> vector<8x8x8xf32>
    %39 = vector.extract_strided_slice %28 {offsets = [0, 0, 64], sizes = [2, 8, 8], strides = [1, 1, 1]} : vector<2x8x96xf32> to vector<2x8x8xf32>
    %40 = vector.extract_strided_slice %28 {offsets = [0, 0, 72], sizes = [2, 8, 8], strides = [1, 1, 1]} : vector<2x8x96xf32> to vector<2x8x8xf32>
    %41 = vector.extract_strided_slice %28 {offsets = [0, 0, 80], sizes = [2, 8, 8], strides = [1, 1, 1]} : vector<2x8x96xf32> to vector<2x8x8xf32>
    %42 = vector.extract_strided_slice %28 {offsets = [0, 0, 88], sizes = [2, 8, 8], strides = [1, 1, 1]} : vector<2x8x96xf32> to vector<2x8x8xf32>
    %43 = tpu.concatenate %39, %40, %41, %42 in 0 : vector<2x8x8xf32>, vector<2x8x8xf32>, vector<2x8x8xf32>, vector<2x8x8xf32> -> vector<8x8x8xf32>
    "tpu.trace_start"() <{level = 10 : i32, message = "nqd,nkd->nqk"}> : () -> ()
    %cst_13 = arith.constant dense<0.000000e+00> : vector<8x8x8xf32>
    %44 = tpu.matmul %33, %38, %cst_13 {dimension_numbers = #tpu.dot_dimension_numbers<[2], [2], [1], [1], [0, 0, 0, 1, 1, 1], [0], [0]>} : vector<8x8x8xf32>, vector<8x8x8xf32>, vector<8x8x8xf32> -> vector<8x8x8xf32>
    "tpu.trace_stop"() : () -> ()
    %45 = tpu.iota {dimensions = array<i32: 0>} : vector<8x8xi32>
    %46 = tpu.iota {dimensions = array<i32: 1>} : vector<8x8xi32>
    %47 = arith.cmpi sge, %45, %46 : vector<8x8xi32>
    %48 = vector.shape_cast %47 : vector<8x8xi1> to vector<1x8x8xi1>
    %cst_14 = arith.constant -1.000000e+30 : f32
    %49 = vector.shape_cast %48 : vector<1x8x8xi1> to vector<1x8x8xi1>
    %50 = vector.broadcast %49 : vector<1x8x8xi1> to vector<8x8x8xi1>
    %51 = vector.broadcast %cst_14 : f32 to vector<8x8x8xf32>
    %52 = arith.select %50, %44, %51 : vector<8x8x8xi1>, vector<8x8x8xf32>
    %cst_15 = arith.constant dense<0xFF800000> : vector<8x8xf32>
    %53 = vector.multi_reduction <maximumf>, %52, %cst_15 [2] : vector<8x8x8xf32> to vector<8x8xf32>
    %54 = vector.shape_cast %53 : vector<8x8xf32> to vector<8x8x1xf32>
    %55 = vector.broadcast %54 : vector<8x8x1xf32> to vector<8x8x8xf32>
    %56 = arith.subf %52, %55 : vector<8x8x8xf32>
    %57 = math.exp %56 : vector<8x8x8xf32>
    %cst_16 = arith.constant dense<0.000000e+00> : vector<8x8xf32>
    %58 = vector.multi_reduction <add>, %57, %cst_16 [2] : vector<8x8x8xf32> to vector<8x8xf32>
    %59 = vector.shape_cast %58 : vector<8x8xf32> to vector<8x8x1xf32>
    %60 = tpu.reciprocal %59 {approx = true} : vector<8x8x1xf32> -> vector<8x8x1xf32>
    %61 = vector.broadcast %60 : vector<8x8x1xf32> to vector<8x8x8xf32>
    %62 = arith.mulf %57, %61 : vector<8x8x8xf32>
    "tpu.trace_start"() <{level = 10 : i32, message = "nqk,nkd->nqd"}> : () -> ()
    %cst_17 = arith.constant dense<0.000000e+00> : vector<8x8x8xf32>
    %63 = tpu.matmul %62, %43, %cst_17 {dimension_numbers = #tpu.dot_dimension_numbers<[2], [1], [1], [2], [0, 0, 0, 1, 1, 2], [0], [0]>} : vector<8x8x8xf32>, vector<8x8x8xf32>, vector<8x8x8xf32> -> vector<8x8x8xf32>
    "tpu.trace_stop"() : () -> ()
    %64 = vector.extract_strided_slice %63 {offsets = [0, 0, 0], sizes = [2, 8, 8], strides = [1, 1, 1]} : vector<8x8x8xf32> to vector<2x8x8xf32>
    %65 = vector.extract_strided_slice %63 {offsets = [2, 0, 0], sizes = [2, 8, 8], strides = [1, 1, 1]} : vector<8x8x8xf32> to vector<2x8x8xf32>
    %66 = vector.extract_strided_slice %63 {offsets = [4, 0, 0], sizes = [2, 8, 8], strides = [1, 1, 1]} : vector<8x8x8xf32> to vector<2x8x8xf32>
    %67 = vector.extract_strided_slice %63 {offsets = [6, 0, 0], sizes = [2, 8, 8], strides = [1, 1, 1]} : vector<8x8x8xf32> to vector<2x8x8xf32>
    %68 = tpu.concatenate %64, %65, %66, %67 in 2 : vector<2x8x8xf32>, vector<2x8x8xf32>, vector<2x8x8xf32>, vector<2x8x8xf32> -> vector<2x8x32xf32>
    %69 = vector.shape_cast %68 : vector<2x8x32xf32> to vector<16x32xf32>
    %c0_18 = arith.constant 0 : index
    %c0_19 = arith.constant 0 : index
    %70 = vector.load %arg3[%c0_18, %c0_19] : memref<32x32xf32, #tpu.memory_space<vmem>>, vector<32x32xf32>
    %cst_20 = arith.constant dense<0.000000e+00> : vector<16x32xf32>
    %71 = tpu.matmul %69, %70, %cst_20 {dimension_numbers = #tpu.dot_dimension_numbers<[1], [0], [0], [1], [0, 0, 1, 1], [], []>} : vector<16x32xf32>, vector<32x32xf32>, vector<16x32xf32> -> vector<16x32xf32>
    %72 = arith.addf %1, %71 : vector<16x32xf32>
    %cst_21 = arith.constant dense<0.000000e+00> : vector<16xf32>
    %73 = vector.multi_reduction <add>, %72, %cst_21 [1] : vector<16x32xf32> to vector<16xf32>
    %74 = vector.shape_cast %73 : vector<16xf32> to vector<16x1xf32>
    %cst_22 = arith.constant 3.200000e+01 : f32
    %75 = vector.broadcast %cst_22 : f32 to vector<16x1xf32>
    %76 = arith.divf %74, %75 : vector<16x1xf32>
    %77 = vector.broadcast %76 : vector<16x1xf32> to vector<16x32xf32>
    %78 = arith.subf %72, %77 : vector<16x32xf32>
    %79 = arith.mulf %78, %78 : vector<16x32xf32>
    %cst_23 = arith.constant dense<0.000000e+00> : vector<16xf32>
    %80 = vector.multi_reduction <add>, %79, %cst_23 [1] : vector<16x32xf32> to vector<16xf32>
    %81 = vector.shape_cast %80 : vector<16xf32> to vector<16x1xf32>
    %cst_24 = arith.constant 3.200000e+01 : f32
    %82 = vector.broadcast %cst_24 : f32 to vector<16x1xf32>
    %83 = arith.divf %81, %82 : vector<16x1xf32>
    %84 = vector.broadcast %76 : vector<16x1xf32> to vector<16x32xf32>
    %85 = arith.subf %72, %84 : vector<16x32xf32>
    %cst_25 = arith.constant 9.99999974E-6 : f32
    %86 = vector.broadcast %cst_25 : f32 to vector<16x1xf32>
    %87 = arith.addf %83, %86 : vector<16x1xf32>
    %88 = math.rsqrt %87 : vector<16x1xf32>
    %89 = vector.broadcast %88 : vector<16x1xf32> to vector<16x32xf32>
    %90 = arith.mulf %85, %89 : vector<16x32xf32>
    %c0_26 = arith.constant 0 : index
    %c0_27 = arith.constant 0 : index
    %91 = vector.load %arg8[%c0_26, %c0_27] : memref<1x32xf32, #tpu.memory_space<vmem>>, vector<1x32xf32>
    %92 = vector.broadcast %91 : vector<1x32xf32> to vector<16x32xf32>
    %93 = arith.mulf %90, %92 : vector<16x32xf32>
    %c0_28 = arith.constant 0 : index
    %c0_29 = arith.constant 0 : index
    %94 = vector.load %arg9[%c0_28, %c0_29] : memref<1x32xf32, #tpu.memory_space<vmem>>, vector<1x32xf32>
    %95 = vector.broadcast %94 : vector<1x32xf32> to vector<16x32xf32>
    %96 = arith.addf %93, %95 : vector<16x32xf32>
    %c0_30 = arith.constant 0 : index
    %c0_31 = arith.constant 0 : index
    %97 = vector.load %arg4[%c0_30, %c0_31] : memref<32x128xf32, #tpu.memory_space<vmem>>, vector<32x128xf32>
    %cst_32 = arith.constant dense<0.000000e+00> : vector<16x128xf32>
    %98 = tpu.matmul %96, %97, %cst_32 {dimension_numbers = #tpu.dot_dimension_numbers<[1], [0], [0], [1], [0, 0, 1, 1], [], []>} : vector<16x32xf32>, vector<32x128xf32>, vector<16x128xf32> -> vector<16x128xf32>
    %99 = arith.mulf %98, %98 : vector<16x128xf32>
    %100 = arith.mulf %98, %99 : vector<16x128xf32>
    %cst_33 = arith.constant 4.471500e-02 : f32
    %101 = vector.broadcast %cst_33 : f32 to vector<16x128xf32>
    %102 = arith.mulf %101, %100 : vector<16x128xf32>
    %103 = arith.addf %98, %102 : vector<16x128xf32>
    %cst_34 = arith.constant 0.797884583 : f32
    %104 = vector.broadcast %cst_34 : f32 to vector<16x128xf32>
    %105 = arith.mulf %104, %103 : vector<16x128xf32>
    %106 = math.tanh %105 : vector<16x128xf32>
    %cst_35 = arith.constant 1.000000e+00 : f32
    %107 = vector.broadcast %cst_35 : f32 to vector<16x128xf32>
    %108 = arith.addf %107, %106 : vector<16x128xf32>
    %cst_36 = arith.constant 5.000000e-01 : f32
    %109 = vector.broadcast %cst_36 : f32 to vector<16x128xf32>
    %110 = arith.mulf %109, %108 : vector<16x128xf32>
    %111 = arith.mulf %98, %110 : vector<16x128xf32>
    %c0_37 = arith.constant 0 : index
    %c0_38 = arith.constant 0 : index
    %112 = vector.load %arg5[%c0_37, %c0_38] : memref<128x32xf32, #tpu.memory_space<vmem>>, vector<128x32xf32>
    %cst_39 = arith.constant dense<0.000000e+00> : vector<16x32xf32>
    %113 = tpu.matmul %111, %112, %cst_39 {dimension_numbers = #tpu.dot_dimension_numbers<[1], [0], [0], [1], [0, 0, 1, 1], [], []>} : vector<16x128xf32>, vector<128x32xf32>, vector<16x32xf32> -> vector<16x32xf32>
    %114 = arith.addf %72, %113 : vector<16x32xf32>
    %115 = vector.shape_cast %114 : vector<16x32xf32> to vector<2x8x32xf32>
    %c0_40 = arith.constant 0 : index
    %c0_41 = arith.constant 0 : index
    %c0_42 = arith.constant 0 : index
    %116 = vector.load %arg11[%c0_40, %c0_41, %c0_42] : memref<2x8x32xf32, #tpu.memory_space<vmem>>, vector<2x8x32xf32>
    tpu.vector_store %arg11[%c0_40, %c0_41, %c0_42], %115 {strides = array<i32>} : memref<2x8x32xf32, #tpu.memory_space<vmem>>, vector<2x8x32xf32>,
    %117 = vector.extract_strided_slice %115 {offsets = [0, 7, 0], sizes = [2, 1, 32], strides = [1, 1, 1]} : vector<2x8x32xf32> to vector<2x1x32xf32>
    %c0_43 = arith.constant 0 : index
    %c0_44 = arith.constant 0 : index
    %118 = vector.load %arg10[%c0_43, %c0_44] : memref<1x32xf32, #tpu.memory_space<vmem>>, vector<1x32xf32>
    %119 = vector.shape_cast %118 : vector<1x32xf32> to vector<1x1x32xf32>
    %120 = vector.broadcast %119 : vector<1x1x32xf32> to vector<2x1x32xf32>
    %121 = arith.addf %117, %120 : vector<2x1x32xf32>
    %c0_45 = arith.constant 0 : index
    %c7 = arith.constant 7 : index
    %c0_46 = arith.constant 0 : index
    %122 = vector.load %arg11[%c0_45, %c7, %c0_46] : memref<2x8x32xf32, #tpu.memory_space<vmem>>, vector<2x1x32xf32>
    tpu.vector_store %arg11[%c0_45, %c7, %c0_46], %121 {strides = array<i32>} : memref<2x8x32xf32, #tpu.memory_space<vmem>>, vector<2x1x32xf32>,
    return
  }
  func.func @transform_0(%arg0: i32) -> (i32, i32, i32) {
    %c0_i32 = arith.constant 0 : i32
    %c0_i32_0 = arith.constant 0 : i32
    %c0_i32_1 = arith.constant 0 : i32
    return %arg0, %c0_i32, %c0_i32_0 : i32, i32, i32
  }
  func.func @transform_1(%arg0: i32) -> (i32, i32) {
    %c0_i32 = arith.constant 0 : i32
    %c0_i32_0 = arith.constant 0 : i32
    %c0_i32_1 = arith.constant 0 : i32
    return %c0_i32, %c0_i32_0 : i32, i32
  }
  func.func @transform_2(%arg0: i32) -> (i32, i32) {
    %c0_i32 = arith.constant 0 : i32
    %c0_i32_0 = arith.constant 0 : i32
    %c0_i32_1 = arith.constant 0 : i32
    return %c0_i32, %c0_i32_0 : i32, i32
  }
  func.func @transform_3(%arg0: i32) -> (i32, i32) {
    %c0_i32 = arith.constant 0 : i32
    %c0_i32_0 = arith.constant 0 : i32
    %c0_i32_1 = arith.constant 0 : i32
    return %c0_i32, %c0_i32_0 : i32, i32
  }
  func.func @transform_4(%arg0: i32) -> (i32, i32) {
    %c0_i32 = arith.constant 0 : i32
    %c0_i32_0 = arith.constant 0 : i32
    %c0_i32_1 = arith.constant 0 : i32
    return %c0_i32, %c0_i32_0 : i32, i32
  }
  func.func @transform_5(%arg0: i32) -> (i32, i32) {
    %c0_i32 = arith.constant 0 : i32
    %c0_i32_0 = arith.constant 0 : i32
    %c0_i32_1 = arith.constant 0 : i32
    return %c0_i32, %c0_i32_0 : i32, i32
  }
  func.func @transform_6(%arg0: i32) -> (i32, i32) {
    %c0_i32 = arith.constant 0 : i32
    %c0_i32_0 = arith.constant 0 : i32
    %c0_i32_1 = arith.constant 0 : i32
    return %c0_i32, %c0_i32_0 : i32, i32
  }
  func.func @transform_7(%arg0: i32) -> (i32, i32) {
    %c0_i32 = arith.constant 0 : i32
    %c0_i32_0 = arith.constant 0 : i32
    %c0_i32_1 = arith.constant 0 : i32
    return %c0_i32, %c0_i32_0 : i32, i32
  }
  func.func @transform_8(%arg0: i32) -> (i32, i32) {
    %c0_i32 = arith.constant 0 : i32
    %c0_i32_0 = arith.constant 0 : i32
    %c0_i32_1 = arith.constant 0 : i32
    return %c0_i32, %c0_i32_0 : i32, i32
  }
  func.func @transform_9(%arg0: i32) -> (i32, i32) {
    %c0_i32 = arith.constant 0 : i32
    %c0_i32_0 = arith.constant 0 : i32
    %c0_i32_1 = arith.constant 0 : i32
    return %c0_i32, %c0_i32_0 : i32, i32
  }
  func.func @transform_10(%arg0: i32) -> (i32, i32, i32) {
    %c0_i32 = arith.constant 0 : i32
    %c0_i32_0 = arith.constant 0 : i32
    %c0_i32_1 = arith.constant 0 : i32
    return %arg0, %c0_i32, %c0_i32_0 : i32, i32, i32
  }
}

</mosaic_0001>

<llo_original>
// kernel: tpu_custom_call.1
$region0: #{tpu_custom_call.1}
  #allocation0 [shape = 'u32[]', space=smem, size = 0x4, offset = 0x4, fixed_abs, tag = 'smem constant byte address 0x4 - core index']
  #allocation1 [shape = 'u32[144,128]{1,0:T(1,128)}', space=vmem, size = 0x12000, scoped, tag = 'internal scratch']
  %s0 = inlined_call_operand.vmem [shape: f32[2,8,32], index: 0, kind: input, shape index: {}]
  %s1 = inlined_call_operand.vmem [shape: f32[32,96], index: 1, kind: input, shape index: {}]
  %s2 = inlined_call_operand.vmem [shape: f32[32,32], index: 2, kind: input, shape index: {}]
  %s3 = inlined_call_operand.vmem [shape: f32[32,128], index: 3, kind: input, shape index: {}]
  %s4 = inlined_call_operand.vmem [shape: f32[128,32], index: 4, kind: input, shape index: {}]
  %s5 = inlined_call_operand.vmem [shape: f32[1,32], index: 5, kind: input, shape index: {}]
  %s6 = inlined_call_operand.vmem [shape: f32[1,32], index: 6, kind: input, shape index: {}]
  %s7 = inlined_call_operand.vmem [shape: f32[1,32], index: 7, kind: input, shape index: {}]
  %s8 = inlined_call_operand.vmem [shape: f32[1,32], index: 8, kind: input, shape index: {}]
  %s9 = inlined_call_operand.vmem [shape: f32[1,32], index: 9, kind: input, shape index: {}]
  %s10 = inlined_call_operand.hbm [shape: f32[2,8,32], index: 10, kind: output, shape index: {}]
  %s11 = sld [smem:[#allocation0]]
  $region50: #{tpu_custom_call.1} parent=0
    _
  %s13 = ssub.s32 1, %s11
  %s14 = scalar_select 0, %s13, %s11
  $region1: #{tpu_custom_call.1} parent=0
    #allocation2 [shape = 'u8[8192]{0}', space=vmem, size = 0x2000, scoped, tag = 'output window, operand 0, single buffered']
    #allocation3 [shape = 's32[1]{0}', space=sflag, size = 0x4, scoped, tag = 'scoped memory for tpu_custom_call.1']
    %15 = vsyncpa [#allocation3], 0
    // Predicated region
    $region2: #{tpu_custom_call.1} parent=1 // pred_check
      _
    $region3: #{tpu_custom_call.1} parent=1 // pred_check_branch
      %17 = sbr.rel (0) target = $region5
    $region4: #{tpu_custom_call.1} parent=1 // pred_region
      _
    $region5: #{tpu_custom_call.1} parent=1 // pred_fallthru
      _
    // Predicated region
    $region6: #{tpu_custom_call.1} parent=1 // pred_check
      _
    $region7: #{tpu_custom_call.1} parent=1 // pred_check_branch
      %19 = sbr.rel (0) target = $region9
    $region8: #{tpu_custom_call.1} parent=1 // pred_region
      _
    $region9: #{tpu_custom_call.1} parent=1 // pred_fallthru
      _
    // Predicated region
    $region10: #{tpu_custom_call.1} parent=1 // pred_check
      _
    $region11: #{tpu_custom_call.1} parent=1 // pred_check_branch
      %21 = sbr.rel (0) target = $region13
    $region12: #{tpu_custom_call.1} parent=1 // pred_region
      _
    $region13: #{tpu_custom_call.1} parent=1 // pred_fallthru
      _
    // Predicated region
    $region14: #{tpu_custom_call.1} parent=1 // pred_check
      _
    $region15: #{tpu_custom_call.1} parent=1 // pred_check_branch
      %23 = sbr.rel (0) target = $region17
    $region16: #{tpu_custom_call.1} parent=1 // pred_region
      _
    $region17: #{tpu_custom_call.1} parent=1 // pred_fallthru
      _
    // Predicated region
    $region18: #{tpu_custom_call.1} parent=1 // pred_check
      _
    $region19: #{tpu_custom_call.1} parent=1 // pred_check_branch
      %25 = sbr.rel (0) target = $region21
    $region20: #{tpu_custom_call.1} parent=1 // pred_region
      _
    $region21: #{tpu_custom_call.1} parent=1 // pred_fallthru
      _
    // Predicated region
    $region22: #{tpu_custom_call.1} parent=1 // pred_check
      _
    $region23: #{tpu_custom_call.1} parent=1 // pred_check_branch
      %27 = sbr.rel (0) target = $region25
    $region24: #{tpu_custom_call.1} parent=1 // pred_region
      _
    $region25: #{tpu_custom_call.1} parent=1 // pred_fallthru
      _
    // Predicated region
    $region26: #{tpu_custom_call.1} parent=1 // pred_check
      _
    $region27: #{tpu_custom_call.1} parent=1 // pred_check_branch
      %29 = sbr.rel (0) target = $region29
    $region28: #{tpu_custom_call.1} parent=1 // pred_region
      _
    $region29: #{tpu_custom_call.1} parent=1 // pred_fallthru
      _
    // Predicated region
    $region30: #{tpu_custom_call.1} parent=1 // pred_check
      _
    $region31: #{tpu_custom_call.1} parent=1 // pred_check_branch
      %31 = sbr.rel (0) target = $region33
    $region32: #{tpu_custom_call.1} parent=1 // pred_region
      _
    $region33: #{tpu_custom_call.1} parent=1 // pred_fallthru
      _
    // Predicated region
    $region34: #{tpu_custom_call.1} parent=1 // pred_check
      _
    $region35: #{tpu_custom_call.1} parent=1 // pred_check_branch
      %33 = sbr.rel (0) target = $region37
    $region36: #{tpu_custom_call.1} parent=1 // pred_region
      _
    $region37: #{tpu_custom_call.1} parent=1 // pred_fallthru
      _
    // Predicated region
    $region38: #{tpu_custom_call.1} parent=1 // pred_check
      _
    $region39: #{tpu_custom_call.1} parent=1 // pred_check_branch
      %35 = sbr.rel (0) target = $region41
    $region40: #{tpu_custom_call.1} parent=1 // pred_region
      _
    $region41: #{tpu_custom_call.1} parent=1 // pred_fallthru
      _
    %v36 = vld [vmem:[%s0] sm:$0xff]
    %v37 = vld [vmem:[%s0 + $0x8] sm:$0xff]
    %vm38 = vcmask 261120
    %v39 = vsel %vm38, %v36, 0.0
    %40 = vadd.xlane.f32.xlu0 %v39
    %v41 = vpop.xlane.xlu0 %40
    %v42 = vsel %vm38, %v37, 0.0
    %43 = vadd.xlane.f32.xlu0 %v42
    %v44 = vpop.xlane.xlu0 %43
    %v45 = vrcp.pop 32.0
    %v46 = vmul.f32 %v41, %v45
    %v47 = vmul.f32 %v44, %v45
    %v48 = vsub.f32 %v36, %v46
    %v49 = vsub.f32 %v37, %v47
    %v50 = vmul.f32 %v48, %v48
    %v51 = vmul.f32 %v49, %v49
    %v52 = vsel %vm38, %v50, 0.0
    %53 = vadd.xlane.f32.xlu0 %v52
    %v54 = vpop.xlane.xlu0 %53
    %v55 = vsel %vm38, %v51, 0.0
    %56 = vadd.xlane.f32.xlu0 %v55
    %v57 = vpop.xlane.xlu0 %56
    %v58 = vmul.f32 %v54, %v45
    %v59 = vmul.f32 %v57, %v45
    %v60 = vadd.f32 %v58, 1e-05
    %v61 = vadd.f32 %v59, 1e-05
    %v62 = vrsqrt.pop %v60
    %v63 = vrsqrt.pop %v61
    %v64 = vmul.f32 %v48, %v62
    %v65 = vmul.f32 %v49, %v63
    %v66 = vld [vmem:[%s5] sm:$0x1]
    %v68 = vlaneseq
    %v69 = vshrl.u32 %v68, 7
    %v70 = vsub.s32 0, %v69
    %v71 = vrot.slane %v66, %v70
    %v73 = vmul.f32 %v64, %v71
    %v74 = vmul.f32 %v65, %v71
    %v75 = vld [vmem:[%s6] sm:$0x1]
    %v77 = vlaneseq
    %v78 = vshrl.u32 %v77, 7
    %v79 = vsub.s32 0, %v78
    %v80 = vrot.slane %v75, %v79
    %v82 = vadd.f32 %v73, %v80
    %v83 = vadd.f32 %v74, %v80
    %v84 = vld [vmem:[%s1] sm:$0xff]
    %v85 = vld [vmem:[%s1 + $0x8] sm:$0xff]
    %v86 = vld [vmem:[%s1 + $0x10] sm:$0xff]
    %v87 = vld [vmem:[%s1 + $0x18] sm:$0xff]
    %v89 = vsel %vm38, %v82, 0
    %v92 = vsel %vm38, %v83, 0
    %94 = vmatprep.subr.mxu0 0.0
    %95 = vmatpush1.msra.mxu0 %v84
    %96 = vmatprep.subr.mxu0 0.0
    %97 = vmatpush1.msra.mxu0 %v85
    %98 = vmatprep.subr.mxu0 0.0
    %99 = vmatpush1.msra.mxu0 %v86
    %100 = vmatprep.subr.mxu0 0.0
    %101 = vmatpush1.msra.mxu0 %v87
    %102 = vmatprep.subr.mxu0 0.0
    %103 = vmatpush1.msra.mxu0 0.0
    %104 = vmatprep.subr.mxu0 0.0
    %105 = vmatpush1.msra.mxu0 0.0
    %106 = vmatprep.subr.mxu0 0.0
    %107 = vmatpush1.msra.mxu0 0.0
    %108 = vmatprep.subr.mxu0 0.0
    %109 = vmatpush1.msra.mxu0 0.0
    %110 = vmatprep.subr.mxu0 0.0
    %111 = vmatpush1.msra.mxu0 0.0
    %112 = vmatprep.subr.mxu0 0.0
    %113 = vmatpush1.msra.mxu0 0.0
    %114 = vmatprep.subr.mxu0 0.0
    %115 = vmatpush1.msra.mxu0 0.0
    %116 = vmatprep.subr.mxu0 0.0
    %117 = vmatpush1.msra.mxu0 0.0
    %118 = vmatprep.subr.mxu0 0.0
    %119 = vmatpush1.msra.mxu0 0.0
    %120 = vmatprep.subr.mxu0 0.0
    %121 = vmatpush1.msra.mxu0 0.0
    %122 = vmatprep.subr.mxu0 0.0
    %123 = vmatpush1.msra.mxu0 0.0
    %124 = vmatprep.subr.mxu0 0.0
    %125 = vmatpush1.msra.mxu0 0.0
    %126 = vmatprep.subr.mxu0 0.0
    %127 = vmatpush1.msra.mxu0 0.0
    %128 = vmatprep.subr.mxu0 0.0
    %129 = vmatpush1.msra.mxu0 0.0
    %130 = vmatprep.subr.mxu0 0.0
    %131 = vmatpush1.msra.mxu0 0.0
    %132 = vmatprep.subr.mxu0 0.0
    %133 = vmatpush1.msra.mxu0 0.0
    %134 = vmatprep.subr.mxu0 0.0
    %135 = vmatpush1.msra.mxu0 0.0
    %136 = vmatprep.subr.mxu0 0.0
    %137 = vmatpush1.msra.mxu0 0.0
    %138 = vmatprep.subr.mxu0 0.0
    %139 = vmatpush1.msra.mxu0 0.0
    %140 = vmatprep.subr.mxu0 0.0
    %141 = vmatpush1.msra.mxu0 0.0
    %142 = vmatprep.subr.mxu0 0.0
    %143 = vmatpush1.msra.mxu0 0.0
    %144 = vmatprep.subr.mxu0 0.0
    %145 = vmatpush1.msra.mxu0 0.0
    %146 = vmatprep.subr.mxu0 0.0
    %147 = vmatpush1.msra.mxu0 0.0
    %148 = vmatprep.subr.mxu0 0.0
    %149 = vmatpush1.msra.mxu0 0.0
    %150 = vmatprep.subr.mxu0 0.0
    %151 = vmatpush1.msra.mxu0 0.0
    %152 = vmatprep.subr.mxu0 0.0
    %153 = vmatpush1.msra.mxu0 0.0
    %154 = vmatprep.subr.mxu0 0.0
    %155 = vmatpush1.msra.mxu0 0.0
    %156 = vmatprep.subr.mxu0 0.0
    %157 = vmatpush1.msra.mxu0 0.0
    %158 = vmatprep.mubr.f32.mxu0 0.0
    %159 = vmatmul.mubr.f32.gmra.mrb[0].mxu0 %v89
    %v160 = vpop.f32.mrb[0].mxu0
    %v161 = vadd.f32 0.0, %v160
    %v162 = vpop.f32.mrb[0].mxu0
    %163 = vmatprep.mubr.f32.mxu0 0.0
    %164 = vmatmul.mubr.f32.gmra.mrb[0].mxu0 %v92
    %v165 = vpop.f32.mrb[0].mxu0
    %v166 = vadd.f32 0.0, %v165
    %v167 = vpop.f32.mrb[0].mxu0
    %168 = vdwg.mxu0
    %171 = vrot.lane.b32.xlu0 %v161, 120
    %v172 = vpop.permute.xlu0 %171
    %173 = vrot.lane.b32.xlu0 %v166, 120
    %v174 = vpop.permute.xlu0 %173
    %175 = vrot.lane.b32.xlu0 %v161, 112
    %v176 = vpop.permute.xlu0 %175
    %177 = vrot.lane.b32.xlu0 %v166, 112
    %v178 = vpop.permute.xlu0 %177
    %179 = vrot.lane.b32.xlu0 %v161, 104
    %v180 = vpop.permute.xlu0 %179
    %181 = vrot.lane.b32.xlu0 %v166, 104
    %v182 = vpop.permute.xlu0 %181
    %183 = vrot.lane.b32.xlu0 %v161, 96
    %v184 = vpop.permute.xlu0 %183
    %vm185 = vcmask 64512
    %v186 = vsel %vm185, %v161, 0
    %v188 = vsel %vm185, %v184, 0
    %190 = vmatprep.subr.mxu0 0.0
    %191 = vmatpush1.xpose.msra.mxu0 %v188
    %192 = vmatprep.subr.mxu0 0.0
    %193 = vmatpush1.xpose.msra.mxu0 0.0
    %194 = vmatprep.subr.mxu0 0.0
    %195 = vmatpush1.xpose.msra.mxu0 0.0
    %196 = vmatprep.subr.mxu0 0.0
    %197 = vmatpush1.xpose.msra.mxu0 0.0
    %198 = vmatprep.subr.mxu0 0.0
    %199 = vmatpush1.xpose.msra.mxu0 0.0
    %200 = vmatprep.subr.mxu0 0.0
    %201 = vmatpush1.xpose.msra.mxu0 0.0
    %202 = vmatprep.subr.mxu0 0.0
    %203 = vmatpush1.xpose.msra.mxu0 0.0
    %204 = vmatprep.subr.mxu0 0.0
    %205 = vmatpush1.xpose.msra.mxu0 0.0
    %206 = vmatprep.subr.mxu0 0.0
    %207 = vmatpush1.xpose.msra.mxu0 0.0
    %208 = vmatprep.subr.mxu0 0.0
    %209 = vmatpush1.xpose.msra.mxu0 0.0
    %210 = vmatprep.subr.mxu0 0.0
    %211 = vmatpush1.xpose.msra.mxu0 0.0
    %212 = vmatprep.subr.mxu0 0.0
    %213 = vmatpush1.xpose.msra.mxu0 0.0
    %214 = vmatprep.subr.mxu0 0.0
    %215 = vmatpush1.xpose.msra.mxu0 0.0
    %216 = vmatprep.subr.mxu0 0.0
    %217 = vmatpush1.xpose.msra.mxu0 0.0
    %218 = vmatprep.subr.mxu0 0.0
    %219 = vmatpush1.xpose.msra.mxu0 0.0
    %220 = vmatprep.subr.mxu0 0.0
    %221 = vmatpush1.xpose.msra.mxu0 0.0
    %222 = vmatprep.subr.mxu0 0.0
    %223 = vmatpush1.xpose.msra.mxu0 0.0
    %224 = vmatprep.subr.mxu0 0.0
    %225 = vmatpush1.xpose.msra.mxu0 0.0
    %226 = vmatprep.subr.mxu0 0.0
    %227 = vmatpush1.xpose.msra.mxu0 0.0
    %228 = vmatprep.subr.mxu0 0.0
    %229 = vmatpush1.xpose.msra.mxu0 0.0
    %230 = vmatprep.subr.mxu0 0.0
    %231 = vmatpush1.xpose.msra.mxu0 0.0
    %232 = vmatprep.subr.mxu0 0.0
    %233 = vmatpush1.xpose.msra.mxu0 0.0
    %234 = vmatprep.subr.mxu0 0.0
    %235 = vmatpush1.xpose.msra.mxu0 0.0
    %236 = vmatprep.subr.mxu0 0.0
    %237 = vmatpush1.xpose.msra.mxu0 0.0
    %238 = vmatprep.subr.mxu0 0.0
    %239 = vmatpush1.xpose.msra.mxu0 0.0
    %240 = vmatprep.subr.mxu0 0.0
    %241 = vmatpush1.xpose.msra.mxu0 0.0
    %242 = vmatprep.subr.mxu0 0.0
    %243 = vmatpush1.xpose.msra.mxu0 0.0
    %244 = vmatprep.subr.mxu0 0.0
    %245 = vmatpush1.xpose.msra.mxu0 0.0
    %246 = vmatprep.subr.mxu0 0.0
    %247 = vmatpush1.xpose.msra.mxu0 0.0
    %248 = vmatprep.subr.mxu0 0.0
    %249 = vmatpush1.xpose.msra.mxu0 0.0
    %250 = vmatprep.subr.mxu0 0.0
    %251 = vmatpush1.xpose.msra.mxu0 0.0
    %252 = vmatprep.subr.mxu0 0.0
    %253 = vmatpush1.xpose.msra.mxu0 0.0
    %254 = vmatprep.mubr.f32.mxu0 0.0
    %255 = vmatmul.mubr.f32.gmra.mrb[0].mxu0 %v186
    %v256 = vpop.f32.mrb[0].mxu0
    %v257 = vadd.f32 0.0, %v256
    %v258 = vpop.f32.mrb[0].mxu0
    %259 = vdwg.mxu0
    %260 = vrot.lane.b32.xlu0 %v166, 96
    %v261 = vpop.permute.xlu0 %260
    %v262 = vsel %vm185, %v166, 0
    %v264 = vsel %vm185, %v261, 0
    %266 = vmatprep.subr.mxu0 0.0
    %267 = vmatpush1.xpose.msra.mxu0 %v264
    %268 = vmatprep.subr.mxu0 0.0
    %269 = vmatpush1.xpose.msra.mxu0 0.0
    %270 = vmatprep.subr.mxu0 0.0
    %271 = vmatpush1.xpose.msra.mxu0 0.0
    %272 = vmatprep.subr.mxu0 0.0
    %273 = vmatpush1.xpose.msra.mxu0 0.0
    %274 = vmatprep.subr.mxu0 0.0
    %275 = vmatpush1.xpose.msra.mxu0 0.0
    %276 = vmatprep.subr.mxu0 0.0
    %277 = vmatpush1.xpose.msra.mxu0 0.0
    %278 = vmatprep.subr.mxu0 0.0
    %279 = vmatpush1.xpose.msra.mxu0 0.0
    %280 = vmatprep.subr.mxu0 0.0
    %281 = vmatpush1.xpose.msra.mxu0 0.0
    %282 = vmatprep.subr.mxu0 0.0
    %283 = vmatpush1.xpose.msra.mxu0 0.0
    %284 = vmatprep.subr.mxu0 0.0
    %285 = vmatpush1.xpose.msra.mxu0 0.0
    %286 = vmatprep.subr.mxu0 0.0
    %287 = vmatpush1.xpose.msra.mxu0 0.0
    %288 = vmatprep.subr.mxu0 0.0
    %289 = vmatpush1.xpose.msra.mxu0 0.0
    %290 = vmatprep.subr.mxu0 0.0
    %291 = vmatpush1.xpose.msra.mxu0 0.0
    %292 = vmatprep.subr.mxu0 0.0
    %293 = vmatpush1.xpose.msra.mxu0 0.0
    %294 = vmatprep.subr.mxu0 0.0
    %295 = vmatpush1.xpose.msra.mxu0 0.0
    %296 = vmatprep.subr.mxu0 0.0
    %297 = vmatpush1.xpose.msra.mxu0 0.0
    %298 = vmatprep.subr.mxu0 0.0
    %299 = vmatpush1.xpose.msra.mxu0 0.0
    %300 = vmatprep.subr.mxu0 0.0
    %301 = vmatpush1.xpose.msra.mxu0 0.0
    %302 = vmatprep.subr.mxu0 0.0
    %303 = vmatpush1.xpose.msra.mxu0 0.0
    %304 = vmatprep.subr.mxu0 0.0
    %305 = vmatpush1.xpose.msra.mxu0 0.0
    %306 = vmatprep.subr.mxu0 0.0
    %307 = vmatpush1.xpose.msra.mxu0 0.0
    %308 = vmatprep.subr.mxu0 0.0
    %309 = vmatpush1.xpose.msra.mxu0 0.0
    %310 = vmatprep.subr.mxu0 0.0
    %311 = vmatpush1.xpose.msra.mxu0 0.0
    %312 = vmatprep.subr.mxu0 0.0
    %313 = vmatpush1.xpose.msra.mxu0 0.0
    %314 = vmatprep.subr.mxu0 0.0
    %315 = vmatpush1.xpose.msra.mxu0 0.0
    %316 = vmatprep.subr.mxu0 0.0
    %317 = vmatpush1.xpose.msra.mxu0 0.0
    %318 = vmatprep.subr.mxu0 0.0
    %319 = vmatpush1.xpose.msra.mxu0 0.0
    %320 = vmatprep.subr.mxu0 0.0
    %321 = vmatpush1.xpose.msra.mxu0 0.0
    %322 = vmatprep.subr.mxu0 0.0
    %323 = vmatpush1.xpose.msra.mxu0 0.0
    %324 = vmatprep.subr.mxu0 0.0
    %325 = vmatpush1.xpose.msra.mxu0 0.0
    %326 = vmatprep.subr.mxu0 0.0
    %327 = vmatpush1.xpose.msra.mxu0 0.0
    %328 = vmatprep.subr.mxu0 0.0
    %329 = vmatpush1.xpose.msra.mxu0 0.0
    %330 = vmatprep.mubr.f32.mxu0 0.0
    %331 = vmatmul.mubr.f32.gmra.mrb[0].mxu0 %v262
    %v332 = vpop.f32.mrb[0].mxu0
    %v333 = vadd.f32 0.0, %v332
    %v334 = vpop.f32.mrb[0].mxu0
    %335 = vdwg.mxu0
    %336 = vrot.lane.b32.xlu0 %v172, 96
    %v337 = vpop.permute.xlu0 %336
    %v338 = vsel %vm185, %v172, 0
    %v340 = vsel %vm185, %v337, 0
    %342 = vmatprep.subr.mxu0 0.0
    %343 = vmatpush1.xpose.msra.mxu0 %v340
    %344 = vmatprep.subr.mxu0 0.0
    %345 = vmatpush1.xpose.msra.mxu0 0.0
    %346 = vmatprep.subr.mxu0 0.0
    %347 = vmatpush1.xpose.msra.mxu0 0.0
    %348 = vmatprep.subr.mxu0 0.0
    %349 = vmatpush1.xpose.msra.mxu0 0.0
    %350 = vmatprep.subr.mxu0 0.0
    %351 = vmatpush1.xpose.msra.mxu0 0.0
    %352 = vmatprep.subr.mxu0 0.0
    %353 = vmatpush1.xpose.msra.mxu0 0.0
    %354 = vmatprep.subr.mxu0 0.0
    %355 = vmatpush1.xpose.msra.mxu0 0.0
    %356 = vmatprep.subr.mxu0 0.0
    %357 = vmatpush1.xpose.msra.mxu0 0.0
    %358 = vmatprep.subr.mxu0 0.0
    %359 = vmatpush1.xpose.msra.mxu0 0.0
    %360 = vmatprep.subr.mxu0 0.0
    %361 = vmatpush1.xpose.msra.mxu0 0.0
    %362 = vmatprep.subr.mxu0 0.0
    %363 = vmatpush1.xpose.msra.mxu0 0.0
    %364 = vmatprep.subr.mxu0 0.0
    %365 = vmatpush1.xpose.msra.mxu0 0.0
    %366 = vmatprep.subr.mxu0 0.0
    %367 = vmatpush1.xpose.msra.mxu0 0.0
    %368 = vmatprep.subr.mxu0 0.0
    %369 = vmatpush1.xpose.msra.mxu0 0.0
    %370 = vmatprep.subr.mxu0 0.0
    %371 = vmatpush1.xpose.msra.mxu0 0.0
    %372 = vmatprep.subr.mxu0 0.0
    %373 = vmatpush1.xpose.msra.mxu0 0.0
    %374 = vmatprep.subr.mxu0 0.0
    %375 = vmatpush1.xpose.msra.mxu0 0.0
    %376 = vmatprep.subr.mxu0 0.0
    %377 = vmatpush1.xpose.msra.mxu0 0.0
    %378 = vmatprep.subr.mxu0 0.0
    %379 = vmatpush1.xpose.msra.mxu0 0.0
    %380 = vmatprep.subr.mxu0 0.0
    %381 = vmatpush1.xpose.msra.mxu0 0.0
    %382 = vmatprep.subr.mxu0 0.0
    %383 = vmatpush1.xpose.msra.mxu0 0.0
    %384 = vmatprep.subr.mxu0 0.0
    %385 = vmatpush1.xpose.msra.mxu0 0.0
    %386 = vmatprep.subr.mxu0 0.0
    %387 = vmatpush1.xpose.msra.mxu0 0.0
    %388 = vmatprep.subr.mxu0 0.0
    %389 = vmatpush1.xpose.msra.mxu0 0.0
    %390 = vmatprep.subr.mxu0 0.0
    %391 = vmatpush1.xpose.msra.mxu0 0.0
    %392 = vmatprep.subr.mxu0 0.0
    %393 = vmatpush1.xpose.msra.mxu0 0.0
    %394 = vmatprep.subr.mxu0 0.0
    %395 = vmatpush1.xpose.msra.mxu0 0.0
    %396 = vmatprep.subr.mxu0 0.0
    %397 = vmatpush1.xpose.msra.mxu0 0.0
    %398 = vmatprep.subr.mxu0 0.0
    %399 = vmatpush1.xpose.msra.mxu0 0.0
    %400 = vmatprep.subr.mxu0 0.0
    %401 = vmatpush1.xpose.msra.mxu0 0.0
    %402 = vmatprep.subr.mxu0 0.0
    %403 = vmatpush1.xpose.msra.mxu0 0.0
    %404 = vmatprep.subr.mxu0 0.0
    %405 = vmatpush1.xpose.msra.mxu0 0.0
    %406 = vmatprep.mubr.f32.mxu0 0.0
    %407 = vmatmul.mubr.f32.gmra.mrb[0].mxu0 %v338
    %v408 = vpop.f32.mrb[0].mxu0
    %v409 = vadd.f32 0.0, %v408
    %v410 = vpop.f32.mrb[0].mxu0
    %411 = vdwg.mxu0
    %412 = vrot.lane.b32.xlu0 %v174, 96
    %v413 = vpop.permute.xlu0 %412
    %v414 = vsel %vm185, %v174, 0
    %v416 = vsel %vm185, %v413, 0
    %418 = vmatprep.subr.mxu0 0.0
    %419 = vmatpush1.xpose.msra.mxu0 %v416
    %420 = vmatprep.subr.mxu0 0.0
    %421 = vmatpush1.xpose.msra.mxu0 0.0
    %422 = vmatprep.subr.mxu0 0.0
    %423 = vmatpush1.xpose.msra.mxu0 0.0
    %424 = vmatprep.subr.mxu0 0.0
    %425 = vmatpush1.xpose.msra.mxu0 0.0
    %426 = vmatprep.subr.mxu0 0.0
    %427 = vmatpush1.xpose.msra.mxu0 0.0
    %428 = vmatprep.subr.mxu0 0.0
    %429 = vmatpush1.xpose.msra.mxu0 0.0
    %430 = vmatprep.subr.mxu0 0.0
    %431 = vmatpush1.xpose.msra.mxu0 0.0
    %432 = vmatprep.subr.mxu0 0.0
    %433 = vmatpush1.xpose.msra.mxu0 0.0
    %434 = vmatprep.subr.mxu0 0.0
    %435 = vmatpush1.xpose.msra.mxu0 0.0
    %436 = vmatprep.subr.mxu0 0.0
    %437 = vmatpush1.xpose.msra.mxu0 0.0
    %438 = vmatprep.subr.mxu0 0.0
    %439 = vmatpush1.xpose.msra.mxu0 0.0
    %440 = vmatprep.subr.mxu0 0.0
    %441 = vmatpush1.xpose.msra.mxu0 0.0
    %442 = vmatprep.subr.mxu0 0.0
    %443 = vmatpush1.xpose.msra.mxu0 0.0
    %444 = vmatprep.subr.mxu0 0.0
    %445 = vmatpush1.xpose.msra.mxu0 0.0
    %446 = vmatprep.subr.mxu0 0.0
    %447 = vmatpush1.xpose.msra.mxu0 0.0
    %448 = vmatprep.subr.mxu0 0.0
    %449 = vmatpush1.xpose.msra.mxu0 0.0
    %450 = vmatprep.subr.mxu0 0.0
    %451 = vmatpush1.xpose.msra.mxu0 0.0
    %452 = vmatprep.subr.mxu0 0.0
    %453 = vmatpush1.xpose.msra.mxu0 0.0
    %454 = vmatprep.subr.mxu0 0.0
    %455 = vmatpush1.xpose.msra.mxu0 0.0
    %456 = vmatprep.subr.mxu0 0.0
    %457 = vmatpush1.xpose.msra.mxu0 0.0
    %458 = vmatprep.subr.mxu0 0.0
    %459 = vmatpush1.xpose.msra.mxu0 0.0
    %460 = vmatprep.subr.mxu0 0.0
    %461 = vmatpush1.xpose.msra.mxu0 0.0
    %462 = vmatprep.subr.mxu0 0.0
    %463 = vmatpush1.xpose.msra.mxu0 0.0
    %464 = vmatprep.subr.mxu0 0.0
    %465 = vmatpush1.xpose.msra.mxu0 0.0
    %466 = vmatprep.subr.mxu0 0.0
    %467 = vmatpush1.xpose.msra.mxu0 0.0
    %468 = vmatprep.subr.mxu0 0.0
    %469 = vmatpush1.xpose.msra.mxu0 0.0
    %470 = vmatprep.subr.mxu0 0.0
    %471 = vmatpush1.xpose.msra.mxu0 0.0
    %472 = vmatprep.subr.mxu0 0.0
    %473 = vmatpush1.xpose.msra.mxu0 0.0
    %474 = vmatprep.subr.mxu0 0.0
    %475 = vmatpush1.xpose.msra.mxu0 0.0
    %476 = vmatprep.subr.mxu0 0.0
    %477 = vmatpush1.xpose.msra.mxu0 0.0
    %478 = vmatprep.subr.mxu0 0.0
    %479 = vmatpush1.xpose.msra.mxu0 0.0
    %480 = vmatprep.subr.mxu0 0.0
    %481 = vmatpush1.xpose.msra.mxu0 0.0
    %482 = vmatprep.mubr.f32.mxu0 0.0
    %483 = vmatmul.mubr.f32.gmra.mrb[0].mxu0 %v414
    %v484 = vpop.f32.mrb[0].mxu0
    %v485 = vadd.f32 0.0, %v484
    %v486 = vpop.f32.mrb[0].mxu0
    %487 = vdwg.mxu0
    %488 = vrot.lane.b32.xlu0 %v176, 96
    %v489 = vpop.permute.xlu0 %488
    %v490 = vsel %vm185, %v176, 0
    %v492 = vsel %vm185, %v489, 0
    %494 = vmatprep.subr.mxu0 0.0
    %495 = vmatpush1.xpose.msra.mxu0 %v492
    %496 = vmatprep.subr.mxu0 0.0
    %497 = vmatpush1.xpose.msra.mxu0 0.0
    %498 = vmatprep.subr.mxu0 0.0
    %499 = vmatpush1.xpose.msra.mxu0 0.0
    %500 = vmatprep.subr.mxu0 0.0
    %501 = vmatpush1.xpose.msra.mxu0 0.0
    %502 = vmatprep.subr.mxu0 0.0
    %503 = vmatpush1.xpose.msra.mxu0 0.0
    %504 = vmatprep.subr.mxu0 0.0
    %505 = vmatpush1.xpose.msra.mxu0 0.0
    %506 = vmatprep.subr.mxu0 0.0
    %507 = vmatpush1.xpose.msra.mxu0 0.0
    %508 = vmatprep.subr.mxu0 0.0
    %509 = vmatpush1.xpose.msra.mxu0 0.0
    %510 = vmatprep.subr.mxu0 0.0
    %511 = vmatpush1.xpose.msra.mxu0 0.0
    %512 = vmatprep.subr.mxu0 0.0
    %513 = vmatpush1.xpose.msra.mxu0 0.0
    %514 = vmatprep.subr.mxu0 0.0
    %515 = vmatpush1.xpose.msra.mxu0 0.0
    %516 = vmatprep.subr.mxu0 0.0
    %517 = vmatpush1.xpose.msra.mxu0 0.0
    %518 = vmatprep.subr.mxu0 0.0
    %519 = vmatpush1.xpose.msra.mxu0 0.0
    %520 = vmatprep.subr.mxu0 0.0
    %521 = vmatpush1.xpose.msra.mxu0 0.0
    %522 = vmatprep.subr.mxu0 0.0
    %523 = vmatpush1.xpose.msra.mxu0 0.0
    %524 = vmatprep.subr.mxu0 0.0
    %525 = vmatpush1.xpose.msra.mxu0 0.0
    %526 = vmatprep.subr.mxu0 0.0
    %527 = vmatpush1.xpose.msra.mxu0 0.0
    %528 = vmatprep.subr.mxu0 0.0
    %529 = vmatpush1.xpose.msra.mxu0 0.0
    %530 = vmatprep.subr.mxu0 0.0
    %531 = vmatpush1.xpose.msra.mxu0 0.0
    %532 = vmatprep.subr.mxu0 0.0
    %533 = vmatpush1.xpose.msra.mxu0 0.0
    %534 = vmatprep.subr.mxu0 0.0
    %535 = vmatpush1.xpose.msra.mxu0 0.0
    %536 = vmatprep.subr.mxu0 0.0
    %537 = vmatpush1.xpose.msra.mxu0 0.0
    %538 = vmatprep.subr.mxu0 0.0
    %539 = vmatpush1.xpose.msra.mxu0 0.0
    %540 = vmatprep.subr.mxu0 0.0
    %541 = vmatpush1.xpose.msra.mxu0 0.0
    %542 = vmatprep.subr.mxu0 0.0
    %543 = vmatpush1.xpose.msra.mxu0 0.0
    %544 = vmatprep.subr.mxu0 0.0
    %545 = vmatpush1.xpose.msra.mxu0 0.0
    %546 = vmatprep.subr.mxu0 0.0
    %547 = vmatpush1.xpose.msra.mxu0 0.0
    %548 = vmatprep.subr.mxu0 0.0
    %549 = vmatpush1.xpose.msra.mxu0 0.0
    %550 = vmatprep.subr.mxu0 0.0
    %551 = vmatpush1.xpose.msra.mxu0 0.0
    %552 = vmatprep.subr.mxu0 0.0
    %553 = vmatpush1.xpose.msra.mxu0 0.0
    %554 = vmatprep.subr.mxu0 0.0
    %555 = vmatpush1.xpose.msra.mxu0 0.0
    %556 = vmatprep.subr.mxu0 0.0
    %557 = vmatpush1.xpose.msra.mxu0 0.0
    %558 = vmatprep.mubr.f32.mxu0 0.0
    %559 = vmatmul.mubr.f32.gmra.mrb[0].mxu0 %v490
    %v560 = vpop.f32.mrb[0].mxu0
    %v561 = vadd.f32 0.0, %v560
    %v562 = vpop.f32.mrb[0].mxu0
    %563 = vdwg.mxu0
    %564 = vrot.lane.b32.xlu0 %v178, 96
    %v565 = vpop.permute.xlu0 %564
    %v566 = vsel %vm185, %v178, 0
    %v568 = vsel %vm185, %v565, 0
    %570 = vmatprep.subr.mxu0 0.0
    %571 = vmatpush1.xpose.msra.mxu0 %v568
    %572 = vmatprep.subr.mxu0 0.0
    %573 = vmatpush1.xpose.msra.mxu0 0.0
    %574 = vmatprep.subr.mxu0 0.0
    %575 = vmatpush1.xpose.msra.mxu0 0.0
    %576 = vmatprep.subr.mxu0 0.0
    %577 = vmatpush1.xpose.msra.mxu0 0.0
    %578 = vmatprep.subr.mxu0 0.0
    %579 = vmatpush1.xpose.msra.mxu0 0.0
    %580 = vmatprep.subr.mxu0 0.0
    %581 = vmatpush1.xpose.msra.mxu0 0.0
    %582 = vmatprep.subr.mxu0 0.0
    %583 = vmatpush1.xpose.msra.mxu0 0.0
    %584 = vmatprep.subr.mxu0 0.0
    %585 = vmatpush1.xpose.msra.mxu0 0.0
    %586 = vmatprep.subr.mxu0 0.0
    %587 = vmatpush1.xpose.msra.mxu0 0.0
    %588 = vmatprep.subr.mxu0 0.0
    %589 = vmatpush1.xpose.msra.mxu0 0.0
    %590 = vmatprep.subr.mxu0 0.0
    %591 = vmatpush1.xpose.msra.mxu0 0.0
    %592 = vmatprep.subr.mxu0 0.0
    %593 = vmatpush1.xpose.msra.mxu0 0.0
    %594 = vmatprep.subr.mxu0 0.0
    %595 = vmatpush1.xpose.msra.mxu0 0.0
    %596 = vmatprep.subr.mxu0 0.0
    %597 = vmatpush1.xpose.msra.mxu0 0.0
    %598 = vmatprep.subr.mxu0 0.0
    %599 = vmatpush1.xpose.msra.mxu0 0.0
    %600 = vmatprep.subr.mxu0 0.0
    %601 = vmatpush1.xpose.msra.mxu0 0.0
    %602 = vmatprep.subr.mxu0 0.0
    %603 = vmatpush1.xpose.msra.mxu0 0.0
    %604 = vmatprep.subr.mxu0 0.0
    %605 = vmatpush1.xpose.msra.mxu0 0.0
    %606 = vmatprep.subr.mxu0 0.0
    %607 = vmatpush1.xpose.msra.mxu0 0.0
    %608 = vmatprep.subr.mxu0 0.0
    %609 = vmatpush1.xpose.msra.mxu0 0.0
    %610 = vmatprep.subr.mxu0 0.0
    %611 = vmatpush1.xpose.msra.mxu0 0.0
    %612 = vmatprep.subr.mxu0 0.0
    %613 = vmatpush1.xpose.msra.mxu0 0.0
    %614 = vmatprep.subr.mxu0 0.0
    %615 = vmatpush1.xpose.msra.mxu0 0.0
    %616 = vmatprep.subr.mxu0 0.0
    %617 = vmatpush1.xpose.msra.mxu0 0.0
    %618 = vmatprep.subr.mxu0 0.0
    %619 = vmatpush1.xpose.msra.mxu0 0.0
    %620 = vmatprep.subr.mxu0 0.0
    %621 = vmatpush1.xpose.msra.mxu0 0.0
    %622 = vmatprep.subr.mxu0 0.0
    %623 = vmatpush1.xpose.msra.mxu0 0.0
    %624 = vmatprep.subr.mxu0 0.0
    %625 = vmatpush1.xpose.msra.mxu0 0.0
    %626 = vmatprep.subr.mxu0 0.0
    %627 = vmatpush1.xpose.msra.mxu0 0.0
    %628 = vmatprep.subr.mxu0 0.0
    %629 = vmatpush1.xpose.msra.mxu0 0.0
    %630 = vmatprep.subr.mxu0 0.0
    %631 = vmatpush1.xpose.msra.mxu0 0.0
    %632 = vmatprep.subr.mxu0 0.0
    %633 = vmatpush1.xpose.msra.mxu0 0.0
    %634 = vmatprep.mubr.f32.mxu0 0.0
    %635 = vmatmul.mubr.f32.gmra.mrb[0].mxu0 %v566
    %v636 = vpop.f32.mrb[0].mxu0
    %v637 = vadd.f32 0.0, %v636
    %v638 = vpop.f32.mrb[0].mxu0
    %639 = vdwg.mxu0
    %640 = vrot.lane.b32.xlu0 %v180, 96
    %v641 = vpop.permute.xlu0 %640
    %v642 = vsel %vm185, %v180, 0
    %v644 = vsel %vm185, %v641, 0
    %646 = vmatprep.subr.mxu0 0.0
    %647 = vmatpush1.xpose.msra.mxu0 %v644
    %648 = vmatprep.subr.mxu0 0.0
    %649 = vmatpush1.xpose.msra.mxu0 0.0
    %650 = vmatprep.subr.mxu0 0.0
    %651 = vmatpush1.xpose.msra.mxu0 0.0
    %652 = vmatprep.subr.mxu0 0.0
    %653 = vmatpush1.xpose.msra.mxu0 0.0
    %654 = vmatprep.subr.mxu0 0.0
    %655 = vmatpush1.xpose.msra.mxu0 0.0
    %656 = vmatprep.subr.mxu0 0.0
    %657 = vmatpush1.xpose.msra.mxu0 0.0
    %658 = vmatprep.subr.mxu0 0.0
    %659 = vmatpush1.xpose.msra.mxu0 0.0
    %660 = vmatprep.subr.mxu0 0.0
    %661 = vmatpush1.xpose.msra.mxu0 0.0
    %662 = vmatprep.subr.mxu0 0.0
    %663 = vmatpush1.xpose.msra.mxu0 0.0
    %664 = vmatprep.subr.mxu0 0.0
    %665 = vmatpush1.xpose.msra.mxu0 0.0
    %666 = vmatprep.subr.mxu0 0.0
    %667 = vmatpush1.xpose.msra.mxu0 0.0
    %668 = vmatprep.subr.mxu0 0.0
    %669 = vmatpush1.xpose.msra.mxu0 0.0
    %670 = vmatprep.subr.mxu0 0.0
    %671 = vmatpush1.xpose.msra.mxu0 0.0
    %672 = vmatprep.subr.mxu0 0.0
    %673 = vmatpush1.xpose.msra.mxu0 0.0
    %674 = vmatprep.subr.mxu0 0.0
    %675 = vmatpush1.xpose.msra.mxu0 0.0
    %676 = vmatprep.subr.mxu0 0.0
    %677 = vmatpush1.xpose.msra.mxu0 0.0
    %678 = vmatprep.subr.mxu0 0.0
    %679 = vmatpush1.xpose.msra.mxu0 0.0
    %680 = vmatprep.subr.mxu0 0.0
    %681 = vmatpush1.xpose.msra.mxu0 0.0
    %682 = vmatprep.subr.mxu0 0.0
    %683 = vmatpush1.xpose.msra.mxu0 0.0
    %684 = vmatprep.subr.mxu0 0.0
    %685 = vmatpush1.xpose.msra.mxu0 0.0
    %686 = vmatprep.subr.mxu0 0.0
    %687 = vmatpush1.xpose.msra.mxu0 0.0
    %688 = vmatprep.subr.mxu0 0.0
    %689 = vmatpush1.xpose.msra.mxu0 0.0
    %690 = vmatprep.subr.mxu0 0.0
    %691 = vmatpush1.xpose.msra.mxu0 0.0
    %692 = vmatprep.subr.mxu0 0.0
    %693 = vmatpush1.xpose.msra.mxu0 0.0
    %694 = vmatprep.subr.mxu0 0.0
    %695 = vmatpush1.xpose.msra.mxu0 0.0
    %696 = vmatprep.subr.mxu0 0.0
    %697 = vmatpush1.xpose.msra.mxu0 0.0
    %698 = vmatprep.subr.mxu0 0.0
    %699 = vmatpush1.xpose.msra.mxu0 0.0
    %700 = vmatprep.subr.mxu0 0.0
    %701 = vmatpush1.xpose.msra.mxu0 0.0
    %702 = vmatprep.subr.mxu0 0.0
    %703 = vmatpush1.xpose.msra.mxu0 0.0
    %704 = vmatprep.subr.mxu0 0.0
    %705 = vmatpush1.xpose.msra.mxu0 0.0
    %706 = vmatprep.subr.mxu0 0.0
    %707 = vmatpush1.xpose.msra.mxu0 0.0
    %708 = vmatprep.subr.mxu0 0.0
    %709 = vmatpush1.xpose.msra.mxu0 0.0
    %710 = vmatprep.mubr.f32.mxu0 0.0
    %711 = vmatmul.mubr.f32.gmra.mrb[0].mxu0 %v642
    %v712 = vpop.f32.mrb[0].mxu0
    %v713 = vadd.f32 0.0, %v712
    %v714 = vpop.f32.mrb[0].mxu0
    %715 = vdwg.mxu0
    %716 = vrot.lane.b32.xlu0 %v182, 96
    %v717 = vpop.permute.xlu0 %716
    %v718 = vsel %vm185, %v182, 0
    %v720 = vsel %vm185, %v717, 0
    %722 = vmatprep.subr.mxu0 0.0
    %723 = vmatpush1.xpose.msra.mxu0 %v720
    %724 = vmatprep.subr.mxu0 0.0
    %725 = vmatpush1.xpose.msra.mxu0 0.0
    %726 = vmatprep.subr.mxu0 0.0
    %727 = vmatpush1.xpose.msra.mxu0 0.0
    %728 = vmatprep.subr.mxu0 0.0
    %729 = vmatpush1.xpose.msra.mxu0 0.0
    %730 = vmatprep.subr.mxu0 0.0
    %731 = vmatpush1.xpose.msra.mxu0 0.0
    %732 = vmatprep.subr.mxu0 0.0
    %733 = vmatpush1.xpose.msra.mxu0 0.0
    %734 = vmatprep.subr.mxu0 0.0
    %735 = vmatpush1.xpose.msra.mxu0 0.0
    %736 = vmatprep.subr.mxu0 0.0
    %737 = vmatpush1.xpose.msra.mxu0 0.0
    %738 = vmatprep.subr.mxu0 0.0
    %739 = vmatpush1.xpose.msra.mxu0 0.0
    %740 = vmatprep.subr.mxu0 0.0
    %741 = vmatpush1.xpose.msra.mxu0 0.0
    %742 = vmatprep.subr.mxu0 0.0
    %743 = vmatpush1.xpose.msra.mxu0 0.0
    %744 = vmatprep.subr.mxu0 0.0
    %745 = vmatpush1.xpose.msra.mxu0 0.0
    %746 = vmatprep.subr.mxu0 0.0
    %747 = vmatpush1.xpose.msra.mxu0 0.0
    %748 = vmatprep.subr.mxu0 0.0
    %749 = vmatpush1.xpose.msra.mxu0 0.0
    %750 = vmatprep.subr.mxu0 0.0
    %751 = vmatpush1.xpose.msra.mxu0 0.0
    %752 = vmatprep.subr.mxu0 0.0
    %753 = vmatpush1.xpose.msra.mxu0 0.0
    %754 = vmatprep.subr.mxu0 0.0
    %755 = vmatpush1.xpose.msra.mxu0 0.0
    %756 = vmatprep.subr.mxu0 0.0
    %757 = vmatpush1.xpose.msra.mxu0 0.0
    %758 = vmatprep.subr.mxu0 0.0
    %759 = vmatpush1.xpose.msra.mxu0 0.0
    %760 = vmatprep.subr.mxu0 0.0
    %761 = vmatpush1.xpose.msra.mxu0 0.0
    %762 = vmatprep.subr.mxu0 0.0
    %763 = vmatpush1.xpose.msra.mxu0 0.0
    %764 = vmatprep.subr.mxu0 0.0
    %765 = vmatpush1.xpose.msra.mxu0 0.0
    %766 = vmatprep.subr.mxu0 0.0
    %767 = vmatpush1.xpose.msra.mxu0 0.0
    %768 = vmatprep.subr.mxu0 0.0
    %769 = vmatpush1.xpose.msra.mxu0 0.0
    %770 = vmatprep.subr.mxu0 0.0
    %771 = vmatpush1.xpose.msra.mxu0 0.0
    %772 = vmatprep.subr.mxu0 0.0
    %773 = vmatpush1.xpose.msra.mxu0 0.0
    %774 = vmatprep.subr.mxu0 0.0
    %775 = vmatpush1.xpose.msra.mxu0 0.0
    %776 = vmatprep.subr.mxu0 0.0
    %777 = vmatpush1.xpose.msra.mxu0 0.0
    %778 = vmatprep.subr.mxu0 0.0
    %779 = vmatpush1.xpose.msra.mxu0 0.0
    %780 = vmatprep.subr.mxu0 0.0
    %781 = vmatpush1.xpose.msra.mxu0 0.0
    %782 = vmatprep.subr.mxu0 0.0
    %783 = vmatpush1.xpose.msra.mxu0 0.0
    %784 = vmatprep.subr.mxu0 0.0
    %785 = vmatpush1.xpose.msra.mxu0 0.0
    %786 = vmatprep.mubr.f32.mxu0 0.0
    %787 = vmatmul.mubr.f32.gmra.mrb[0].mxu0 %v718
    %v788 = vpop.f32.mrb[0].mxu0
    %v789 = vadd.f32 0.0, %v788
    %v790 = vpop.f32.mrb[0].mxu0
    %791 = vdwg.mxu0
    %v792 = vlaneseq
    %v793 = vshrl.u32 %v792, 7
    %v794 = vlaneseq
    %v795 = vand.u32 %v794, 127
    %vm796 = vcmp.ge.s32.totalorder %v793, %v795
    %v797 = vsel %vm796, 1, 0
    %vm798 = vcmp.eq.s32.totalorder %v797, 1
    %v799 = vsel %vm798, %v257, -1e+30
    %v800 = vsel %vm798, %v333, -1e+30
    %v801 = vsel %vm798, %v409, -1e+30
    %v802 = vsel %vm798, %v485, -1e+30
    %v803 = vsel %vm798, %v561, -1e+30
    %v804 = vsel %vm798, %v637, -1e+30
    %v805 = vsel %vm798, %v713, -1e+30
    %v806 = vsel %vm798, %v789, -1e+30
    %v807 = vsel %vm185, %v799, -inf
    %808 = vmax.xlane.f32.xlu0 %v807
    %v809 = vpop.xlane.xlu0 %808
    %v810 = vsel %vm185, %v800, -inf
    %811 = vmax.xlane.f32.xlu0 %v810
    %v812 = vpop.xlane.xlu0 %811
    %v813 = vsel %vm185, %v801, -inf
    %814 = vmax.xlane.f32.xlu0 %v813
    %v815 = vpop.xlane.xlu0 %814
    %v816 = vsel %vm185, %v802, -inf
    %817 = vmax.xlane.f32.xlu0 %v816
    %v818 = vpop.xlane.xlu0 %817
    %v819 = vsel %vm185, %v803, -inf
    %820 = vmax.xlane.f32.xlu0 %v819
    %v821 = vpop.xlane.xlu0 %820
    %v822 = vsel %vm185, %v804, -inf
    %823 = vmax.xlane.f32.xlu0 %v822
    %v824 = vpop.xlane.xlu0 %823
    %v825 = vsel %vm185, %v805, -inf
    %826 = vmax.xlane.f32.xlu0 %v825
    %v827 = vpop.xlane.xlu0 %826
    %v828 = vsel %vm185, %v806, -inf
    %829 = vmax.xlane.f32.xlu0 %v828
    %v830 = vpop.xlane.xlu0 %829
    %v831 = vsub.f32 %v799, %v809
    %v832 = vsub.f32 %v800, %v812
    %v833 = vsub.f32 %v801, %v815
    %v834 = vsub.f32 %v802, %v818
    %v835 = vsub.f32 %v803, %v821
    %v836 = vsub.f32 %v804, %v824
    %v837 = vsub.f32 %v805, %v827
    %v838 = vsub.f32 %v806, %v830
    %v839 = vmul.f32 %v831, 1.442695
    %v840 = vpow.pop %v839
    %v841 = vmul.f32 %v832, 1.442695
    %v842 = vpow.pop %v841
    %v843 = vmul.f32 %v833, 1.442695
    %v844 = vpow.pop %v843
    %v845 = vmul.f32 %v834, 1.442695
    %v846 = vpow.pop %v845
    %v847 = vmul.f32 %v835, 1.442695
    %v848 = vpow.pop %v847
    %v849 = vmul.f32 %v836, 1.442695
    %v850 = vpow.pop %v849
    %v851 = vmul.f32 %v837, 1.442695
    %v852 = vpow.pop %v851
    %v853 = vmul.f32 %v838, 1.442695
    %v854 = vpow.pop %v853
    %v855 = vsel %vm185, %v840, 0.0
    %856 = vadd.xlane.f32.xlu0 %v855
    %v857 = vpop.xlane.xlu0 %856
    %v858 = vsel %vm185, %v842, 0.0
    %859 = vadd.xlane.f32.xlu0 %v858
    %v860 = vpop.xlane.xlu0 %859
    %v861 = vsel %vm185, %v844, 0.0
    %862 = vadd.xlane.f32.xlu0 %v861
    %v863 = vpop.xlane.xlu0 %862
    %v864 = vsel %vm185, %v846, 0.0
    %865 = vadd.xlane.f32.xlu0 %v864
    %v866 = vpop.xlane.xlu0 %865
    %v867 = vsel %vm185, %v848, 0.0
    %868 = vadd.xlane.f32.xlu0 %v867
    %v869 = vpop.xlane.xlu0 %868
    %v870 = vsel %vm185, %v850, 0.0
    %871 = vadd.xlane.f32.xlu0 %v870
    %v872 = vpop.xlane.xlu0 %871
    %v873 = vsel %vm185, %v852, 0.0
    %874 = vadd.xlane.f32.xlu0 %v873
    %v875 = vpop.xlane.xlu0 %874
    %v876 = vsel %vm185, %v854, 0.0
    %877 = vadd.xlane.f32.xlu0 %v876
    %v878 = vpop.xlane.xlu0 %877
    %v879 = vrcp.pop %v857
    %v880 = vrcp.pop %v860
    %v881 = vrcp.pop %v863
    %v882 = vrcp.pop %v866
    %v883 = vrcp.pop %v869
    %v884 = vrcp.pop %v872
    %v885 = vrcp.pop %v875
    %v886 = vrcp.pop %v878
    %v887 = vmul.f32 %v840, %v879
    %v888 = vmul.f32 %v842, %v880
    %v889 = vmul.f32 %v844, %v881
    %v890 = vmul.f32 %v846, %v882
    %v891 = vmul.f32 %v848, %v883
    %v892 = vmul.f32 %v850, %v884
    %v893 = vmul.f32 %v852, %v885
    %v894 = vmul.f32 %v854, %v886
    %895 = vrot.lane.b32.xlu0 %v161, 64
    %v896 = vpop.permute.xlu0 %895
    %v899 = vsel %vm185, %v887, 0
    %901 = vmatprep.subr.mxu0 0.0
    %902 = vmatpush1.msra.mxu0 %v896
    %903 = vmatprep.subr.mxu0 0.0
    %904 = vmatpush1.msra.mxu0 0.0
    %905 = vmatprep.subr.mxu0 0.0
    %906 = vmatpush1.msra.mxu0 0.0
    %907 = vmatprep.subr.mxu0 0.0
    %908 = vmatpush1.msra.mxu0 0.0
    %909 = vmatprep.subr.mxu0 0.0
    %910 = vmatpush1.msra.mxu0 0.0
    %911 = vmatprep.subr.mxu0 0.0
    %912 = vmatpush1.msra.mxu0 0.0
    %913 = vmatprep.subr.mxu0 0.0
    %914 = vmatpush1.msra.mxu0 0.0
    %915 = vmatprep.subr.mxu0 0.0
    %916 = vmatpush1.msra.mxu0 0.0
    %917 = vmatprep.subr.mxu0 0.0
    %918 = vmatpush1.msra.mxu0 0.0
    %919 = vmatprep.subr.mxu0 0.0
    %920 = vmatpush1.msra.mxu0 0.0
    %921 = vmatprep.subr.mxu0 0.0
    %922 = vmatpush1.msra.mxu0 0.0
    %923 = vmatprep.subr.mxu0 0.0
    %924 = vmatpush1.msra.mxu0 0.0
    %925 = vmatprep.subr.mxu0 0.0
    %926 = vmatpush1.msra.mxu0 0.0
    %927 = vmatprep.subr.mxu0 0.0
    %928 = vmatpush1.msra.mxu0 0.0
    %929 = vmatprep.subr.mxu0 0.0
    %930 = vmatpush1.msra.mxu0 0.0
    %931 = vmatprep.subr.mxu0 0.0
    %932 = vmatpush1.msra.mxu0 0.0
    %933 = vmatprep.subr.mxu0 0.0
    %934 = vmatpush1.msra.mxu0 0.0
    %935 = vmatprep.subr.mxu0 0.0
    %936 = vmatpush1.msra.mxu0 0.0
    %937 = vmatprep.subr.mxu0 0.0
    %938 = vmatpush1.msra.mxu0 0.0
    %939 = vmatprep.subr.mxu0 0.0
    %940 = vmatpush1.msra.mxu0 0.0
    %941 = vmatprep.subr.mxu0 0.0
    %942 = vmatpush1.msra.mxu0 0.0
    %943 = vmatprep.subr.mxu0 0.0
    %944 = vmatpush1.msra.mxu0 0.0
    %945 = vmatprep.subr.mxu0 0.0
    %946 = vmatpush1.msra.mxu0 0.0
    %947 = vmatprep.subr.mxu0 0.0
    %948 = vmatpush1.msra.mxu0 0.0
    %949 = vmatprep.subr.mxu0 0.0
    %950 = vmatpush1.msra.mxu0 0.0
    %951 = vmatprep.subr.mxu0 0.0
    %952 = vmatpush1.msra.mxu0 0.0
    %953 = vmatprep.subr.mxu0 0.0
    %954 = vmatpush1.msra.mxu0 0.0
    %955 = vmatprep.subr.mxu0 0.0
    %956 = vmatpush1.msra.mxu0 0.0
    %957 = vmatprep.subr.mxu0 0.0
    %958 = vmatpush1.msra.mxu0 0.0
    %959 = vmatprep.subr.mxu0 0.0
    %960 = vmatpush1.msra.mxu0 0.0
    %961 = vmatprep.subr.mxu0 0.0
    %962 = vmatpush1.msra.mxu0 0.0
    %963 = vmatprep.subr.mxu0 0.0
    %964 = vmatpush1.msra.mxu0 0.0
    %965 = vmatprep.mubr.f32.mxu0 0.0
    %966 = vmatmul.mubr.f32.gmra.mrb[0].mxu0 %v899
    %v967 = vpop.f32.mrb[0].mxu0
    %v968 = vadd.f32 0.0, %v967
    %v969 = vpop.f32.mrb[0].mxu0
    %970 = vdwg.mxu0
    %971 = vrot.lane.b32.xlu0 %v166, 64
    %v972 = vpop.permute.xlu0 %971
    %v975 = vsel %vm185, %v888, 0
    %977 = vmatprep.subr.mxu0 0.0
    %978 = vmatpush1.msra.mxu0 %v972
    %979 = vmatprep.subr.mxu0 0.0
    %980 = vmatpush1.msra.mxu0 0.0
    %981 = vmatprep.subr.mxu0 0.0
    %982 = vmatpush1.msra.mxu0 0.0
    %983 = vmatprep.subr.mxu0 0.0
    %984 = vmatpush1.msra.mxu0 0.0
    %985 = vmatprep.subr.mxu0 0.0
    %986 = vmatpush1.msra.mxu0 0.0
    %987 = vmatprep.subr.mxu0 0.0
    %988 = vmatpush1.msra.mxu0 0.0
    %989 = vmatprep.subr.mxu0 0.0
    %990 = vmatpush1.msra.mxu0 0.0
    %991 = vmatprep.subr.mxu0 0.0
    %992 = vmatpush1.msra.mxu0 0.0
    %993 = vmatprep.subr.mxu0 0.0
    %994 = vmatpush1.msra.mxu0 0.0
    %995 = vmatprep.subr.mxu0 0.0
    %996 = vmatpush1.msra.mxu0 0.0
    %997 = vmatprep.subr.mxu0 0.0
    %998 = vmatpush1.msra.mxu0 0.0
    %999 = vmatprep.subr.mxu0 0.0
    %1000 = vmatpush1.msra.mxu0 0.0
    %1001 = vmatprep.subr.mxu0 0.0
    %1002 = vmatpush1.msra.mxu0 0.0
    %1003 = vmatprep.subr.mxu0 0.0
    %1004 = vmatpush1.msra.mxu0 0.0
    %1005 = vmatprep.subr.mxu0 0.0
    %1006 = vmatpush1.msra.mxu0 0.0
    %1007 = vmatprep.subr.mxu0 0.0
    %1008 = vmatpush1.msra.mxu0 0.0
    %1009 = vmatprep.subr.mxu0 0.0
    %1010 = vmatpush1.msra.mxu0 0.0
    %1011 = vmatprep.subr.mxu0 0.0
    %1012 = vmatpush1.msra.mxu0 0.0
    %1013 = vmatprep.subr.mxu0 0.0
    %1014 = vmatpush1.msra.mxu0 0.0
    %1015 = vmatprep.subr.mxu0 0.0
    %1016 = vmatpush1.msra.mxu0 0.0
    %1017 = vmatprep.subr.mxu0 0.0
    %1018 = vmatpush1.msra.mxu0 0.0
    %1019 = vmatprep.subr.mxu0 0.0
    %1020 = vmatpush1.msra.mxu0 0.0
    %1021 = vmatprep.subr.mxu0 0.0
    %1022 = vmatpush1.msra.mxu0 0.0
    %1023 = vmatprep.subr.mxu0 0.0
    %1024 = vmatpush1.msra.mxu0 0.0
    %1025 = vmatprep.subr.mxu0 0.0
    %1026 = vmatpush1.msra.mxu0 0.0
    %1027 = vmatprep.subr.mxu0 0.0
    %1028 = vmatpush1.msra.mxu0 0.0
    %1029 = vmatprep.subr.mxu0 0.0
    %1030 = vmatpush1.msra.mxu0 0.0
    %1031 = vmatprep.subr.mxu0 0.0
    %1032 = vmatpush1.msra.mxu0 0.0
    %1033 = vmatprep.subr.mxu0 0.0
    %1034 = vmatpush1.msra.mxu0 0.0
    %1035 = vmatprep.subr.mxu0 0.0
    %1036 = vmatpush1.msra.mxu0 0.0
    %1037 = vmatprep.subr.mxu0 0.0
    %1038 = vmatpush1.msra.mxu0 0.0
    %1039 = vmatprep.subr.mxu0 0.0
    %1040 = vmatpush1.msra.mxu0 0.0
    %1041 = vmatprep.mubr.f32.mxu0 0.0
    %1042 = vmatmul.mubr.f32.gmra.mrb[0].mxu0 %v975
    %v1043 = vpop.f32.mrb[0].mxu0
    %v1044 = vadd.f32 0.0, %v1043
    %v1045 = vpop.f32.mrb[0].mxu0
    %1046 = vdwg.mxu0
    %1047 = vrot.lane.b32.xlu0 %v172, 64
    %v1048 = vpop.permute.xlu0 %1047
    %v1051 = vsel %vm185, %v889, 0
    %1053 = vmatprep.subr.mxu0 0.0
    %1054 = vmatpush1.msra.mxu0 %v1048
    %1055 = vmatprep.subr.mxu0 0.0
    %1056 = vmatpush1.msra.mxu0 0.0
    %1057 = vmatprep.subr.mxu0 0.0
    %1058 = vmatpush1.msra.mxu0 0.0
    %1059 = vmatprep.subr.mxu0 0.0
    %1060 = vmatpush1.msra.mxu0 0.0
    %1061 = vmatprep.subr.mxu0 0.0
    %1062 = vmatpush1.msra.mxu0 0.0
    %1063 = vmatprep.subr.mxu0 0.0
    %1064 = vmatpush1.msra.mxu0 0.0
    %1065 = vmatprep.subr.mxu0 0.0
    %1066 = vmatpush1.msra.mxu0 0.0
    %1067 = vmatprep.subr.mxu0 0.0
    %1068 = vmatpush1.msra.mxu0 0.0
    %1069 = vmatprep.subr.mxu0 0.0
    %1070 = vmatpush1.msra.mxu0 0.0
    %1071 = vmatprep.subr.mxu0 0.0
    %1072 = vmatpush1.msra.mxu0 0.0
    %1073 = vmatprep.subr.mxu0 0.0
    %1074 = vmatpush1.msra.mxu0 0.0
    %1075 = vmatprep.subr.mxu0 0.0
    %1076 = vmatpush1.msra.mxu0 0.0
    %1077 = vmatprep.subr.mxu0 0.0
    %1078 = vmatpush1.msra.mxu0 0.0
    %1079 = vmatprep.subr.mxu0 0.0
    %1080 = vmatpush1.msra.mxu0 0.0
    %1081 = vmatprep.subr.mxu0 0.0
    %1082 = vmatpush1.msra.mxu0 0.0
    %1083 = vmatprep.subr.mxu0 0.0
    %1084 = vmatpush1.msra.mxu0 0.0
    %1085 = vmatprep.subr.mxu0 0.0
    %1086 = vmatpush1.msra.mxu0 0.0
    %1087 = vmatprep.subr.mxu0 0.0
    %1088 = vmatpush1.msra.mxu0 0.0
    %1089 = vmatprep.subr.mxu0 0.0
    %1090 = vmatpush1.msra.mxu0 0.0
    %1091 = vmatprep.subr.mxu0 0.0
    %1092 = vmatpush1.msra.mxu0 0.0
    %1093 = vmatprep.subr.mxu0 0.0
    %1094 = vmatpush1.msra.mxu0 0.0
    %1095 = vmatprep.subr.mxu0 0.0
    %1096 = vmatpush1.msra.mxu0 0.0
    %1097 = vmatprep.subr.mxu0 0.0
    %1098 = vmatpush1.msra.mxu0 0.0
    %1099 = vmatprep.subr.mxu0 0.0
    %1100 = vmatpush1.msra.mxu0 0.0
    %1101 = vmatprep.subr.mxu0 0.0
    %1102 = vmatpush1.msra.mxu0 0.0
    %1103 = vmatprep.subr.mxu0 0.0
    %1104 = vmatpush1.msra.mxu0 0.0
    %1105 = vmatprep.subr.mxu0 0.0
    %1106 = vmatpush1.msra.mxu0 0.0
    %1107 = vmatprep.subr.mxu0 0.0
    %1108 = vmatpush1.msra.mxu0 0.0
    %1109 = vmatprep.subr.mxu0 0.0
    %1110 = vmatpush1.msra.mxu0 0.0
    %1111 = vmatprep.subr.mxu0 0.0
    %1112 = vmatpush1.msra.mxu0 0.0
    %1113 = vmatprep.subr.mxu0 0.0
    %1114 = vmatpush1.msra.mxu0 0.0
    %1115 = vmatprep.subr.mxu0 0.0
    %1116 = vmatpush1.msra.mxu0 0.0
    %1117 = vmatprep.mubr.f32.mxu0 0.0
    %1118 = vmatmul.mubr.f32.gmra.mrb[0].mxu0 %v1051
    %v1119 = vpop.f32.mrb[0].mxu0
    %v1120 = vadd.f32 0.0, %v1119
    %v1121 = vpop.f32.mrb[0].mxu0
    %1122 = vdwg.mxu0
    %1123 = vrot.lane.b32.xlu0 %v174, 64
    %v1124 = vpop.permute.xlu0 %1123
    %v1127 = vsel %vm185, %v890, 0
    %1129 = vmatprep.subr.mxu0 0.0
    %1130 = vmatpush1.msra.mxu0 %v1124
    %1131 = vmatprep.subr.mxu0 0.0
    %1132 = vmatpush1.msra.mxu0 0.0
    %1133 = vmatprep.subr.mxu0 0.0
    %1134 = vmatpush1.msra.mxu0 0.0
    %1135 = vmatprep.subr.mxu0 0.0
    %1136 = vmatpush1.msra.mxu0 0.0
    %1137 = vmatprep.subr.mxu0 0.0
    %1138 = vmatpush1.msra.mxu0 0.0
    %1139 = vmatprep.subr.mxu0 0.0
    %1140 = vmatpush1.msra.mxu0 0.0
    %1141 = vmatprep.subr.mxu0 0.0
    %1142 = vmatpush1.msra.mxu0 0.0
    %1143 = vmatprep.subr.mxu0 0.0
    %1144 = vmatpush1.msra.mxu0 0.0
    %1145 = vmatprep.subr.mxu0 0.0
    %1146 = vmatpush1.msra.mxu0 0.0
    %1147 = vmatprep.subr.mxu0 0.0
    %1148 = vmatpush1.msra.mxu0 0.0
    %1149 = vmatprep.subr.mxu0 0.0
    %1150 = vmatpush1.msra.mxu0 0.0
    %1151 = vmatprep.subr.mxu0 0.0
    %1152 = vmatpush1.msra.mxu0 0.0
    %1153 = vmatprep.subr.mxu0 0.0
    %1154 = vmatpush1.msra.mxu0 0.0
    %1155 = vmatprep.subr.mxu0 0.0
    %1156 = vmatpush1.msra.mxu0 0.0
    %1157 = vmatprep.subr.mxu0 0.0
    %1158 = vmatpush1.msra.mxu0 0.0
    %1159 = vmatprep.subr.mxu0 0.0
    %1160 = vmatpush1.msra.mxu0 0.0
    %1161 = vmatprep.subr.mxu0 0.0
    %1162 = vmatpush1.msra.mxu0 0.0
    %1163 = vmatprep.subr.mxu0 0.0
    %1164 = vmatpush1.msra.mxu0 0.0
    %1165 = vmatprep.subr.mxu0 0.0
    %1166 = vmatpush1.msra.mxu0 0.0
    %1167 = vmatprep.subr.mxu0 0.0
    %1168 = vmatpush1.msra.mxu0 0.0
    %1169 = vmatprep.subr.mxu0 0.0
    %1170 = vmatpush1.msra.mxu0 0.0
    %1171 = vmatprep.subr.mxu0 0.0
    %1172 = vmatpush1.msra.mxu0 0.0
    %1173 = vmatprep.subr.mxu0 0.0
    %1174 = vmatpush1.msra.mxu0 0.0
    %1175 = vmatprep.subr.mxu0 0.0
    %1176 = vmatpush1.msra.mxu0 0.0
    %1177 = vmatprep.subr.mxu0 0.0
    %1178 = vmatpush1.msra.mxu0 0.0
    %1179 = vmatprep.subr.mxu0 0.0
    %1180 = vmatpush1.msra.mxu0 0.0
    %1181 = vmatprep.subr.mxu0 0.0
    %1182 = vmatpush1.msra.mxu0 0.0
    %1183 = vmatprep.subr.mxu0 0.0
    %1184 = vmatpush1.msra.mxu0 0.0
    %1185 = vmatprep.subr.mxu0 0.0
    %1186 = vmatpush1.msra.mxu0 0.0
    %1187 = vmatprep.subr.mxu0 0.0
    %1188 = vmatpush1.msra.mxu0 0.0
    %1189 = vmatprep.subr.mxu0 0.0
    %1190 = vmatpush1.msra.mxu0 0.0
    %1191 = vmatprep.subr.mxu0 0.0
    %1192 = vmatpush1.msra.mxu0 0.0
    %1193 = vmatprep.mubr.f32.mxu0 0.0
    %1194 = vmatmul.mubr.f32.gmra.mrb[0].mxu0 %v1127
    %v1195 = vpop.f32.mrb[0].mxu0
    %v1196 = vadd.f32 0.0, %v1195
    %v1197 = vpop.f32.mrb[0].mxu0
    %1198 = vdwg.mxu0
    %1199 = vrot.lane.b32.xlu0 %v176, 64
    %v1200 = vpop.permute.xlu0 %1199
    %v1203 = vsel %vm185, %v891, 0
    %1205 = vmatprep.subr.mxu0 0.0
    %1206 = vmatpush1.msra.mxu0 %v1200
    %1207 = vmatprep.subr.mxu0 0.0
    %1208 = vmatpush1.msra.mxu0 0.0
    %1209 = vmatprep.subr.mxu0 0.0
    %1210 = vmatpush1.msra.mxu0 0.0
    %1211 = vmatprep.subr.mxu0 0.0
    %1212 = vmatpush1.msra.mxu0 0.0
    %1213 = vmatprep.subr.mxu0 0.0
    %1214 = vmatpush1.msra.mxu0 0.0
    %1215 = vmatprep.subr.mxu0 0.0
    %1216 = vmatpush1.msra.mxu0 0.0
    %1217 = vmatprep.subr.mxu0 0.0
    %1218 = vmatpush1.msra.mxu0 0.0
    %1219 = vmatprep.subr.mxu0 0.0
    %1220 = vmatpush1.msra.mxu0 0.0
    %1221 = vmatprep.subr.mxu0 0.0
    %1222 = vmatpush1.msra.mxu0 0.0
    %1223 = vmatprep.subr.mxu0 0.0
    %1224 = vmatpush1.msra.mxu0 0.0
    %1225 = vmatprep.subr.mxu0 0.0
    %1226 = vmatpush1.msra.mxu0 0.0
    %1227 = vmatprep.subr.mxu0 0.0
    %1228 = vmatpush1.msra.mxu0 0.0
    %1229 = vmatprep.subr.mxu0 0.0
    %1230 = vmatpush1.msra.mxu0 0.0
    %1231 = vmatprep.subr.mxu0 0.0
    %1232 = vmatpush1.msra.mxu0 0.0
    %1233 = vmatprep.subr.mxu0 0.0
    %1234 = vmatpush1.msra.mxu0 0.0
    %1235 = vmatprep.subr.mxu0 0.0
    %1236 = vmatpush1.msra.mxu0 0.0
    %1237 = vmatprep.subr.mxu0 0.0
    %1238 = vmatpush1.msra.mxu0 0.0
    %1239 = vmatprep.subr.mxu0 0.0
    %1240 = vmatpush1.msra.mxu0 0.0
    %1241 = vmatprep.subr.mxu0 0.0
    %1242 = vmatpush1.msra.mxu0 0.0
    %1243 = vmatprep.subr.mxu0 0.0
    %1244 = vmatpush1.msra.mxu0 0.0
    %1245 = vmatprep.subr.mxu0 0.0
    %1246 = vmatpush1.msra.mxu0 0.0
    %1247 = vmatprep.subr.mxu0 0.0
    %1248 = vmatpush1.msra.mxu0 0.0
    %1249 = vmatprep.subr.mxu0 0.0
    %1250 = vmatpush1.msra.mxu0 0.0
    %1251 = vmatprep.subr.mxu0 0.0
    %1252 = vmatpush1.msra.mxu0 0.0
    %1253 = vmatprep.subr.mxu0 0.0
    %1254 = vmatpush1.msra.mxu0 0.0
    %1255 = vmatprep.subr.mxu0 0.0
    %1256 = vmatpush1.msra.mxu0 0.0
    %1257 = vmatprep.subr.mxu0 0.0
    %1258 = vmatpush1.msra.mxu0 0.0
    %1259 = vmatprep.subr.mxu0 0.0
    %1260 = vmatpush1.msra.mxu0 0.0
    %1261 = vmatprep.subr.mxu0 0.0
    %1262 = vmatpush1.msra.mxu0 0.0
    %1263 = vmatprep.subr.mxu0 0.0
    %1264 = vmatpush1.msra.mxu0 0.0
    %1265 = vmatprep.subr.mxu0 0.0
    %1266 = vmatpush1.msra.mxu0 0.0
    %1267 = vmatprep.subr.mxu0 0.0
    %1268 = vmatpush1.msra.mxu0 0.0
    %1269 = vmatprep.mubr.f32.mxu0 0.0
    %1270 = vmatmul.mubr.f32.gmra.mrb[0].mxu0 %v1203
    %v1271 = vpop.f32.mrb[0].mxu0
    %v1272 = vadd.f32 0.0, %v1271
    %v1273 = vpop.f32.mrb[0].mxu0
    %1274 = vdwg.mxu0
    %1275 = vrot.lane.b32.xlu0 %v178, 64
    %v1276 = vpop.permute.xlu0 %1275
    %v1279 = vsel %vm185, %v892, 0
    %1281 = vmatprep.subr.mxu0 0.0
    %1282 = vmatpush1.msra.mxu0 %v1276
    %1283 = vmatprep.subr.mxu0 0.0
    %1284 = vmatpush1.msra.mxu0 0.0
    %1285 = vmatprep.subr.mxu0 0.0
    %1286 = vmatpush1.msra.mxu0 0.0
    %1287 = vmatprep.subr.mxu0 0.0
    %1288 = vmatpush1.msra.mxu0 0.0
    %1289 = vmatprep.subr.mxu0 0.0
    %1290 = vmatpush1.msra.mxu0 0.0
    %1291 = vmatprep.subr.mxu0 0.0
    %1292 = vmatpush1.msra.mxu0 0.0
    %1293 = vmatprep.subr.mxu0 0.0
    %1294 = vmatpush1.msra.mxu0 0.0
    %1295 = vmatprep.subr.mxu0 0.0
    %1296 = vmatpush1.msra.mxu0 0.0
    %1297 = vmatprep.subr.mxu0 0.0
    %1298 = vmatpush1.msra.mxu0 0.0
    %1299 = vmatprep.subr.mxu0 0.0
    %1300 = vmatpush1.msra.mxu0 0.0
    %1301 = vmatprep.subr.mxu0 0.0
    %1302 = vmatpush1.msra.mxu0 0.0
    %1303 = vmatprep.subr.mxu0 0.0
    %1304 = vmatpush1.msra.mxu0 0.0
    %1305 = vmatprep.subr.mxu0 0.0
    %1306 = vmatpush1.msra.mxu0 0.0
    %1307 = vmatprep.subr.mxu0 0.0
    %1308 = vmatpush1.msra.mxu0 0.0
    %1309 = vmatprep.subr.mxu0 0.0
    %1310 = vmatpush1.msra.mxu0 0.0
    %1311 = vmatprep.subr.mxu0 0.0
    %1312 = vmatpush1.msra.mxu0 0.0
    %1313 = vmatprep.subr.mxu0 0.0
    %1314 = vmatpush1.msra.mxu0 0.0
    %1315 = vmatprep.subr.mxu0 0.0
    %1316 = vmatpush1.msra.mxu0 0.0
    %1317 = vmatprep.subr.mxu0 0.0
    %1318 = vmatpush1.msra.mxu0 0.0
    %1319 = vmatprep.subr.mxu0 0.0
    %1320 = vmatpush1.msra.mxu0 0.0
    %1321 = vmatprep.subr.mxu0 0.0
    %1322 = vmatpush1.msra.mxu0 0.0
    %1323 = vmatprep.subr.mxu0 0.0
    %1324 = vmatpush1.msra.mxu0 0.0
    %1325 = vmatprep.subr.mxu0 0.0
    %1326 = vmatpush1.msra.mxu0 0.0
    %1327 = vmatprep.subr.mxu0 0.0
    %1328 = vmatpush1.msra.mxu0 0.0
    %1329 = vmatprep.subr.mxu0 0.0
    %1330 = vmatpush1.msra.mxu0 0.0
    %1331 = vmatprep.subr.mxu0 0.0
    %1332 = vmatpush1.msra.mxu0 0.0
    %1333 = vmatprep.subr.mxu0 0.0
    %1334 = vmatpush1.msra.mxu0 0.0
    %1335 = vmatprep.subr.mxu0 0.0
    %1336 = vmatpush1.msra.mxu0 0.0
    %1337 = vmatprep.subr.mxu0 0.0
    %1338 = vmatpush1.msra.mxu0 0.0
    %1339 = vmatprep.subr.mxu0 0.0
    %1340 = vmatpush1.msra.mxu0 0.0
    %1341 = vmatprep.subr.mxu0 0.0
    %1342 = vmatpush1.msra.mxu0 0.0
    %1343 = vmatprep.subr.mxu0 0.0
    %1344 = vmatpush1.msra.mxu0 0.0
    %1345 = vmatprep.mubr.f32.mxu0 0.0
    %1346 = vmatmul.mubr.f32.gmra.mrb[0].mxu0 %v1279
    %v1347 = vpop.f32.mrb[0].mxu0
    %v1348 = vadd.f32 0.0, %v1347
    %v1349 = vpop.f32.mrb[0].mxu0
    %1350 = vdwg.mxu0
    %1351 = vrot.lane.b32.xlu0 %v180, 64
    %v1352 = vpop.permute.xlu0 %1351
    %v1355 = vsel %vm185, %v893, 0
    %1357 = vmatprep.subr.mxu0 0.0
    %1358 = vmatpush1.msra.mxu0 %v1352
    %1359 = vmatprep.subr.mxu0 0.0
    %1360 = vmatpush1.msra.mxu0 0.0
    %1361 = vmatprep.subr.mxu0 0.0
    %1362 = vmatpush1.msra.mxu0 0.0
    %1363 = vmatprep.subr.mxu0 0.0
    %1364 = vmatpush1.msra.mxu0 0.0
    %1365 = vmatprep.subr.mxu0 0.0
    %1366 = vmatpush1.msra.mxu0 0.0
    %1367 = vmatprep.subr.mxu0 0.0
    %1368 = vmatpush1.msra.mxu0 0.0
    %1369 = vmatprep.subr.mxu0 0.0
    %1370 = vmatpush1.msra.mxu0 0.0
    %1371 = vmatprep.subr.mxu0 0.0
    %1372 = vmatpush1.msra.mxu0 0.0
    %1373 = vmatprep.subr.mxu0 0.0
    %1374 = vmatpush1.msra.mxu0 0.0
    %1375 = vmatprep.subr.mxu0 0.0
    %1376 = vmatpush1.msra.mxu0 0.0
    %1377 = vmatprep.subr.mxu0 0.0
    %1378 = vmatpush1.msra.mxu0 0.0
    %1379 = vmatprep.subr.mxu0 0.0
    %1380 = vmatpush1.msra.mxu0 0.0
    %1381 = vmatprep.subr.mxu0 0.0
    %1382 = vmatpush1.msra.mxu0 0.0
    %1383 = vmatprep.subr.mxu0 0.0
    %1384 = vmatpush1.msra.mxu0 0.0
    %1385 = vmatprep.subr.mxu0 0.0
    %1386 = vmatpush1.msra.mxu0 0.0
    %1387 = vmatprep.subr.mxu0 0.0
    %1388 = vmatpush1.msra.mxu0 0.0
    %1389 = vmatprep.subr.mxu0 0.0
    %1390 = vmatpush1.msra.mxu0 0.0
    %1391 = vmatprep.subr.mxu0 0.0
    %1392 = vmatpush1.msra.mxu0 0.0
    %1393 = vmatprep.subr.mxu0 0.0
    %1394 = vmatpush1.msra.mxu0 0.0
    %1395 = vmatprep.subr.mxu0 0.0
    %1396 = vmatpush1.msra.mxu0 0.0
    %1397 = vmatprep.subr.mxu0 0.0
    %1398 = vmatpush1.msra.mxu0 0.0
    %1399 = vmatprep.subr.mxu0 0.0
    %1400 = vmatpush1.msra.mxu0 0.0
    %1401 = vmatprep.subr.mxu0 0.0
    %1402 = vmatpush1.msra.mxu0 0.0
    %1403 = vmatprep.subr.mxu0 0.0
    %1404 = vmatpush1.msra.mxu0 0.0
    %1405 = vmatprep.subr.mxu0 0.0
    %1406 = vmatpush1.msra.mxu0 0.0
    %1407 = vmatprep.subr.mxu0 0.0
    %1408 = vmatpush1.msra.mxu0 0.0
    %1409 = vmatprep.subr.mxu0 0.0
    %1410 = vmatpush1.msra.mxu0 0.0
    %1411 = vmatprep.subr.mxu0 0.0
    %1412 = vmatpush1.msra.mxu0 0.0
    %1413 = vmatprep.subr.mxu0 0.0
    %1414 = vmatpush1.msra.mxu0 0.0
    %1415 = vmatprep.subr.mxu0 0.0
    %1416 = vmatpush1.msra.mxu0 0.0
    %1417 = vmatprep.subr.mxu0 0.0
    %1418 = vmatpush1.msra.mxu0 0.0
    %1419 = vmatprep.subr.mxu0 0.0
    %1420 = vmatpush1.msra.mxu0 0.0
    %1421 = vmatprep.mubr.f32.mxu0 0.0
    %1422 = vmatmul.mubr.f32.gmra.mrb[0].mxu0 %v1355
    %v1423 = vpop.f32.mrb[0].mxu0
    %v1424 = vadd.f32 0.0, %v1423
    %v1425 = vpop.f32.mrb[0].mxu0
    %1426 = vdwg.mxu0
    %1427 = vrot.lane.b32.xlu0 %v182, 64
    %v1428 = vpop.permute.xlu0 %1427
    %v1431 = vsel %vm185, %v894, 0
    %1433 = vmatprep.subr.mxu0 0.0
    %1434 = vmatpush1.msra.mxu0 %v1428
    %1435 = vmatprep.subr.mxu0 0.0
    %1436 = vmatpush1.msra.mxu0 0.0
    %1437 = vmatprep.subr.mxu0 0.0
    %1438 = vmatpush1.msra.mxu0 0.0
    %1439 = vmatprep.subr.mxu0 0.0
    %1440 = vmatpush1.msra.mxu0 0.0
    %1441 = vmatprep.subr.mxu0 0.0
    %1442 = vmatpush1.msra.mxu0 0.0
    %1443 = vmatprep.subr.mxu0 0.0
    %1444 = vmatpush1.msra.mxu0 0.0
    %1445 = vmatprep.subr.mxu0 0.0
    %1446 = vmatpush1.msra.mxu0 0.0
    %1447 = vmatprep.subr.mxu0 0.0
    %1448 = vmatpush1.msra.mxu0 0.0
    %1449 = vmatprep.subr.mxu0 0.0
    %1450 = vmatpush1.msra.mxu0 0.0
    %1451 = vmatprep.subr.mxu0 0.0
    %1452 = vmatpush1.msra.mxu0 0.0
    %1453 = vmatprep.subr.mxu0 0.0
    %1454 = vmatpush1.msra.mxu0 0.0
    %1455 = vmatprep.subr.mxu0 0.0
    %1456 = vmatpush1.msra.mxu0 0.0
    %1457 = vmatprep.subr.mxu0 0.0
    %1458 = vmatpush1.msra.mxu0 0.0
    %1459 = vmatprep.subr.mxu0 0.0
    %1460 = vmatpush1.msra.mxu0 0.0
    %1461 = vmatprep.subr.mxu0 0.0
    %1462 = vmatpush1.msra.mxu0 0.0
    %1463 = vmatprep.subr.mxu0 0.0
    %1464 = vmatpush1.msra.mxu0 0.0
    %1465 = vmatprep.subr.mxu0 0.0
    %1466 = vmatpush1.msra.mxu0 0.0
    %1467 = vmatprep.subr.mxu0 0.0
    %1468 = vmatpush1.msra.mxu0 0.0
    %1469 = vmatprep.subr.mxu0 0.0
    %1470 = vmatpush1.msra.mxu0 0.0
    %1471 = vmatprep.subr.mxu0 0.0
    %1472 = vmatpush1.msra.mxu0 0.0
    %1473 = vmatprep.subr.mxu0 0.0
    %1474 = vmatpush1.msra.mxu0 0.0
    %1475 = vmatprep.subr.mxu0 0.0
    %1476 = vmatpush1.msra.mxu0 0.0
    %1477 = vmatprep.subr.mxu0 0.0
    %1478 = vmatpush1.msra.mxu0 0.0
    %1479 = vmatprep.subr.mxu0 0.0
    %1480 = vmatpush1.msra.mxu0 0.0
    %1481 = vmatprep.subr.mxu0 0.0
    %1482 = vmatpush1.msra.mxu0 0.0
    %1483 = vmatprep.subr.mxu0 0.0
    %1484 = vmatpush1.msra.mxu0 0.0
    %1485 = vmatprep.subr.mxu0 0.0
    %1486 = vmatpush1.msra.mxu0 0.0
    %1487 = vmatprep.subr.mxu0 0.0
    %1488 = vmatpush1.msra.mxu0 0.0
    %1489 = vmatprep.subr.mxu0 0.0
    %1490 = vmatpush1.msra.mxu0 0.0
    %1491 = vmatprep.subr.mxu0 0.0
    %1492 = vmatpush1.msra.mxu0 0.0
    %1493 = vmatprep.subr.mxu0 0.0
    %1494 = vmatpush1.msra.mxu0 0.0
    %1495 = vmatprep.subr.mxu0 0.0
    %1496 = vmatpush1.msra.mxu0 0.0
    %1497 = vmatprep.mubr.f32.mxu0 0.0
    %1498 = vmatmul.mubr.f32.gmra.mrb[0].mxu0 %v1431
    %v1499 = vpop.f32.mrb[0].mxu0
    %v1500 = vadd.f32 0.0, %v1499
    %v1501 = vpop.f32.mrb[0].mxu0
    %1502 = vdwg.mxu0
    %1505 = vrot.lane.b32.xlu0 %v1120, 8
    %v1506 = vpop.permute.xlu0 %1505
    %1507 = vrot.lane.b32.xlu0 %v1196, 8
    %v1508 = vpop.permute.xlu0 %1507
    %1513 = vrot.lane.b32.xlu0 %v1272, 16
    %v1514 = vpop.permute.xlu0 %1513
    %1515 = vrot.lane.b32.xlu0 %v1348, 16
    %v1516 = vpop.permute.xlu0 %1515
    %1521 = vrot.lane.b32.xlu0 %v1424, 24
    %v1522 = vpop.permute.xlu0 %1521
    %1523 = vrot.lane.b32.xlu0 %v1500, 24
    %v1524 = vpop.permute.xlu0 %1523
    %v1527 = vsel %vm185, %v968, %v1506
    %v1528 = vsel %vm185, %v1044, %v1508
    %vm1529 = vcmask 130048
    %v1530 = vsel %vm1529, %v1527, %v1514
    %v1531 = vsel %vm1529, %v1528, %v1516
    %vm1532 = vcmask 195584
    %v1533 = vsel %vm1532, %v1530, %v1522
    %v1534 = vsel %vm1532, %v1531, %v1524
    %v1535 = vld [vmem:[%s2] sm:$0xff]
    %v1536 = vld [vmem:[%s2 + $0x8] sm:$0xff]
    %v1537 = vld [vmem:[%s2 + $0x10] sm:$0xff]
    %v1538 = vld [vmem:[%s2 + $0x18] sm:$0xff]
    %v1540 = vsel %vm38, %v1533, 0
    %v1543 = vsel %vm38, %v1534, 0
    %1545 = vmatprep.subr.mxu0 0.0
    %1546 = vmatpush1.msra.mxu0 %v1535
    %1547 = vmatprep.subr.mxu0 0.0
    %1548 = vmatpush1.msra.mxu0 %v1536
    %1549 = vmatprep.subr.mxu0 0.0
    %1550 = vmatpush1.msra.mxu0 %v1537
    %1551 = vmatprep.subr.mxu0 0.0
    %1552 = vmatpush1.msra.mxu0 %v1538
    %1553 = vmatprep.subr.mxu0 0.0
    %1554 = vmatpush1.msra.mxu0 0.0
    %1555 = vmatprep.subr.mxu0 0.0
    %1556 = vmatpush1.msra.mxu0 0.0
    %1557 = vmatprep.subr.mxu0 0.0
    %1558 = vmatpush1.msra.mxu0 0.0
    %1559 = vmatprep.subr.mxu0 0.0
    %1560 = vmatpush1.msra.mxu0 0.0
    %1561 = vmatprep.subr.mxu0 0.0
    %1562 = vmatpush1.msra.mxu0 0.0
    %1563 = vmatprep.subr.mxu0 0.0
    %1564 = vmatpush1.msra.mxu0 0.0
    %1565 = vmatprep.subr.mxu0 0.0
    %1566 = vmatpush1.msra.mxu0 0.0
    %1567 = vmatprep.subr.mxu0 0.0
    %1568 = vmatpush1.msra.mxu0 0.0
    %1569 = vmatprep.subr.mxu0 0.0
    %1570 = vmatpush1.msra.mxu0 0.0
    %1571 = vmatprep.subr.mxu0 0.0
    %1572 = vmatpush1.msra.mxu0 0.0
    %1573 = vmatprep.subr.mxu0 0.0
    %1574 = vmatpush1.msra.mxu0 0.0
    %1575 = vmatprep.subr.mxu0 0.0
    %1576 = vmatpush1.msra.mxu0 0.0
    %1577 = vmatprep.subr.mxu0 0.0
    %1578 = vmatpush1.msra.mxu0 0.0
    %1579 = vmatprep.subr.mxu0 0.0
    %1580 = vmatpush1.msra.mxu0 0.0
    %1581 = vmatprep.subr.mxu0 0.0
    %1582 = vmatpush1.msra.mxu0 0.0
    %1583 = vmatprep.subr.mxu0 0.0
    %1584 = vmatpush1.msra.mxu0 0.0
    %1585 = vmatprep.subr.mxu0 0.0
    %1586 = vmatpush1.msra.mxu0 0.0
    %1587 = vmatprep.subr.mxu0 0.0
    %1588 = vmatpush1.msra.mxu0 0.0
    %1589 = vmatprep.subr.mxu0 0.0
    %1590 = vmatpush1.msra.mxu0 0.0
    %1591 = vmatprep.subr.mxu0 0.0
    %1592 = vmatpush1.msra.mxu0 0.0
    %1593 = vmatprep.subr.mxu0 0.0
    %1594 = vmatpush1.msra.mxu0 0.0
    %1595 = vmatprep.subr.mxu0 0.0
    %1596 = vmatpush1.msra.mxu0 0.0
    %1597 = vmatprep.subr.mxu0 0.0
    %1598 = vmatpush1.msra.mxu0 0.0
    %1599 = vmatprep.subr.mxu0 0.0
    %1600 = vmatpush1.msra.mxu0 0.0
    %1601 = vmatprep.subr.mxu0 0.0
    %1602 = vmatpush1.msra.mxu0 0.0
    %1603 = vmatprep.subr.mxu0 0.0
    %1604 = vmatpush1.msra.mxu0 0.0
    %1605 = vmatprep.subr.mxu0 0.0
    %1606 = vmatpush1.msra.mxu0 0.0
    %1607 = vmatprep.subr.mxu0 0.0
    %1608 = vmatpush1.msra.mxu0 0.0
    %1609 = vmatprep.mubr.f32.mxu0 0.0
    %1610 = vmatmul.mubr.f32.gmra.mrb[0].mxu0 %v1540
    %v1611 = vpop.f32.mrb[0].mxu0
    %v1612 = vadd.f32 0.0, %v1611
    %v1613 = vpop.f32.mrb[0].mxu0
    %1614 = vmatprep.mubr.f32.mxu0 0.0
    %1615 = vmatmul.mubr.f32.gmra.mrb[0].mxu0 %v1543
    %v1616 = vpop.f32.mrb[0].mxu0
    %v1617 = vadd.f32 0.0, %v1616
    %v1618 = vpop.f32.mrb[0].mxu0
    %1619 = vdwg.mxu0
    %v1620 = vadd.f32 %v36, %v1612
    %v1621 = vadd.f32 %v37, %v1617
    %v1622 = vsel %vm38, %v1620, 0.0
    %1623 = vadd.xlane.f32.xlu0 %v1622
    %v1624 = vpop.xlane.xlu0 %1623
    %v1625 = vsel %vm38, %v1621, 0.0
    %1626 = vadd.xlane.f32.xlu0 %v1625
    %v1627 = vpop.xlane.xlu0 %1626
    %v1628 = vmul.f32 %v1624, %v45
    %v1629 = vmul.f32 %v1627, %v45
    %v1630 = vsub.f32 %v1620, %v1628
    %v1631 = vsub.f32 %v1621, %v1629
    %v1632 = vmul.f32 %v1630, %v1630
    %v1633 = vmul.f32 %v1631, %v1631
    %v1634 = vsel %vm38, %v1632, 0.0
    %1635 = vadd.xlane.f32.xlu0 %v1634
    %v1636 = vpop.xlane.xlu0 %1635
    %v1637 = vsel %vm38, %v1633, 0.0
    %1638 = vadd.xlane.f32.xlu0 %v1637
    %v1639 = vpop.xlane.xlu0 %1638
    %v1640 = vmul.f32 %v1636, %v45
    %v1641 = vmul.f32 %v1639, %v45
    %v1642 = vadd.f32 %v1640, 1e-05
    %v1643 = vadd.f32 %v1641, 1e-05
    %v1644 = vrsqrt.pop %v1642
    %v1645 = vrsqrt.pop %v1643
    %v1646 = vmul.f32 %v1630, %v1644
    %v1647 = vmul.f32 %v1631, %v1645
    %v1648 = vld [vmem:[%s7] sm:$0x1]
    %v1650 = vlaneseq
    %v1651 = vshrl.u32 %v1650, 7
    %v1652 = vsub.s32 0, %v1651
    %v1653 = vrot.slane %v1648, %v1652
    %v1655 = vmul.f32 %v1646, %v1653
    %v1656 = vmul.f32 %v1647, %v1653
    %v1657 = vld [vmem:[%s8] sm:$0x1]
    %v1659 = vlaneseq
    %v1660 = vshrl.u32 %v1659, 7
    %v1661 = vsub.s32 0, %v1660
    %v1662 = vrot.slane %v1657, %v1661
    %v1664 = vadd.f32 %v1655, %v1662
    %v1665 = vadd.f32 %v1656, %v1662
    %v1666 = vld [vmem:[%s3] sm:$0xff]
    %v1667 = vld [vmem:[%s3 + $0x8] sm:$0xff]
    %v1668 = vld [vmem:[%s3 + $0x10] sm:$0xff]
    %v1669 = vld [vmem:[%s3 + $0x18] sm:$0xff]
    %v1671 = vsel %vm38, %v1664, 0
    %v1674 = vsel %vm38, %v1665, 0
    %1676 = vmatprep.subr.mxu0 0.0
    %1677 = vmatpush1.msra.mxu0 %v1666
    %1678 = vmatprep.subr.mxu0 0.0
    %1679 = vmatpush1.msra.mxu0 %v1667
    %1680 = vmatprep.subr.mxu0 0.0
    %1681 = vmatpush1.msra.mxu0 %v1668
    %1682 = vmatprep.subr.mxu0 0.0
    %1683 = vmatpush1.msra.mxu0 %v1669
    %1684 = vmatprep.subr.mxu0 0.0
    %1685 = vmatpush1.msra.mxu0 0.0
    %1686 = vmatprep.subr.mxu0 0.0
    %1687 = vmatpush1.msra.mxu0 0.0
    %1688 = vmatprep.subr.mxu0 0.0
    %1689 = vmatpush1.msra.mxu0 0.0
    %1690 = vmatprep.subr.mxu0 0.0
    %1691 = vmatpush1.msra.mxu0 0.0
    %1692 = vmatprep.subr.mxu0 0.0
    %1693 = vmatpush1.msra.mxu0 0.0
    %1694 = vmatprep.subr.mxu0 0.0
    %1695 = vmatpush1.msra.mxu0 0.0
    %1696 = vmatprep.subr.mxu0 0.0
    %1697 = vmatpush1.msra.mxu0 0.0
    %1698 = vmatprep.subr.mxu0 0.0
    %1699 = vmatpush1.msra.mxu0 0.0
    %1700 = vmatprep.subr.mxu0 0.0
    %1701 = vmatpush1.msra.mxu0 0.0
    %1702 = vmatprep.subr.mxu0 0.0
    %1703 = vmatpush1.msra.mxu0 0.0
    %1704 = vmatprep.subr.mxu0 0.0
    %1705 = vmatpush1.msra.mxu0 0.0
    %1706 = vmatprep.subr.mxu0 0.0
    %1707 = vmatpush1.msra.mxu0 0.0
    %1708 = vmatprep.subr.mxu0 0.0
    %1709 = vmatpush1.msra.mxu0 0.0
    %1710 = vmatprep.subr.mxu0 0.0
    %1711 = vmatpush1.msra.mxu0 0.0
    %1712 = vmatprep.subr.mxu0 0.0
    %1713 = vmatpush1.msra.mxu0 0.0
    %1714 = vmatprep.subr.mxu0 0.0
    %1715 = vmatpush1.msra.mxu0 0.0
    %1716 = vmatprep.subr.mxu0 0.0
    %1717 = vmatpush1.msra.mxu0 0.0
    %1718 = vmatprep.subr.mxu0 0.0
    %1719 = vmatpush1.msra.mxu0 0.0
    %1720 = vmatprep.subr.mxu0 0.0
    %1721 = vmatpush1.msra.mxu0 0.0
    %1722 = vmatprep.subr.mxu0 0.0
    %1723 = vmatpush1.msra.mxu0 0.0
    %1724 = vmatprep.subr.mxu0 0.0
    %1725 = vmatpush1.msra.mxu0 0.0
    %1726 = vmatprep.subr.mxu0 0.0
    %1727 = vmatpush1.msra.mxu0 0.0
    %1728 = vmatprep.subr.mxu0 0.0
    %1729 = vmatpush1.msra.mxu0 0.0
    %1730 = vmatprep.subr.mxu0 0.0
    %1731 = vmatpush1.msra.mxu0 0.0
    %1732 = vmatprep.subr.mxu0 0.0
    %1733 = vmatpush1.msra.mxu0 0.0
    %1734 = vmatprep.subr.mxu0 0.0
    %1735 = vmatpush1.msra.mxu0 0.0
    %1736 = vmatprep.subr.mxu0 0.0
    %1737 = vmatpush1.msra.mxu0 0.0
    %1738 = vmatprep.subr.mxu0 0.0
    %1739 = vmatpush1.msra.mxu0 0.0
    %1740 = vmatprep.mubr.f32.mxu0 0.0
    %1741 = vmatmul.mubr.f32.gmra.mrb[0].mxu0 %v1671
    %v1742 = vpop.f32.mrb[0].mxu0
    %v1743 = vadd.f32 0.0, %v1742
    %v1744 = vpop.f32.mrb[0].mxu0
    %1745 = vmatprep.mubr.f32.mxu0 0.0
    %1746 = vmatmul.mubr.f32.gmra.mrb[0].mxu0 %v1674
    %v1747 = vpop.f32.mrb[0].mxu0
    %v1748 = vadd.f32 0.0, %v1747
    %v1749 = vpop.f32.mrb[0].mxu0
    %1750 = vdwg.mxu0
    %v1751 = vmul.f32 %v1743, %v1743
    %v1752 = vmul.f32 %v1748, %v1748
    %v1753 = vmul.f32 %v1743, %v1751
    %v1754 = vmul.f32 %v1748, %v1752
    %v1755 = vmul.f32 %v1753, 0.044715
    %v1756 = vmul.f32 %v1754, 0.044715
    %v1757 = vadd.f32 %v1743, %v1755
    %v1758 = vadd.f32 %v1748, %v1756
    %v1759 = vmul.f32 %v1757, 0.7978846
    %v1760 = vmul.f32 %v1758, 0.7978846
    %v1761 = vtanh.pop %v1759
    %v1762 = vtanh.pop %v1760
    %v1763 = vadd.f32 %v1761, 1.0
    %v1764 = vadd.f32 %v1762, 1.0
    %v1765 = vmul.f32 %v1763, 0.5
    %v1766 = vmul.f32 %v1764, 0.5
    %v1767 = vmul.f32 %v1743, %v1765
    %v1768 = vmul.f32 %v1748, %v1766
    %v1769 = vld [vmem:[%s4] sm:$0xff]
    %v1770 = vld [vmem:[%s4 + $0x8] sm:$0xff]
    %v1771 = vld [vmem:[%s4 + $0x10] sm:$0xff]
    %v1772 = vld [vmem:[%s4 + $0x18] sm:$0xff]
    %v1773 = vld [vmem:[%s4 + $0x20] sm:$0xff]
    %v1774 = vld [vmem:[%s4 + $0x28] sm:$0xff]
    %v1775 = vld [vmem:[%s4 + $0x30] sm:$0xff]
    %v1776 = vld [vmem:[%s4 + $0x38] sm:$0xff]
    %v1777 = vld [vmem:[%s4 + $0x40] sm:$0xff]
    %v1778 = vld [vmem:[%s4 + $0x48] sm:$0xff]
    %v1779 = vld [vmem:[%s4 + $0x50] sm:$0xff]
    %v1780 = vld [vmem:[%s4 + $0x58] sm:$0xff]
    %v1781 = vld [vmem:[%s4 + $0x60] sm:$0xff]
    %v1782 = vld [vmem:[%s4 + $0x68] sm:$0xff]
    %v1783 = vld [vmem:[%s4 + $0x70] sm:$0xff]
    %v1784 = vld [vmem:[%s4 + $0x78] sm:$0xff]
    %1785 = vmatprep.subr.mxu0 0.0
    %1786 = vmatpush1.msra.mxu0 %v1769
    %1787 = vmatprep.subr.mxu0 0.0
    %1788 = vmatpush1.msra.mxu0 %v1770
    %1789 = vmatprep.subr.mxu0 0.0
    %1790 = vmatpush1.msra.mxu0 %v1771
    %1791 = vmatprep.subr.mxu0 0.0
    %1792 = vmatpush1.msra.mxu0 %v1772
    %1793 = vmatprep.subr.mxu0 0.0
    %1794 = vmatpush1.msra.mxu0 %v1773
    %1795 = vmatprep.subr.mxu0 0.0
    %1796 = vmatpush1.msra.mxu0 %v1774
    %1797 = vmatprep.subr.mxu0 0.0
    %1798 = vmatpush1.msra.mxu0 %v1775
    %1799 = vmatprep.subr.mxu0 0.0
    %1800 = vmatpush1.msra.mxu0 %v1776
    %1801 = vmatprep.subr.mxu0 0.0
    %1802 = vmatpush1.msra.mxu0 %v1777
    %1803 = vmatprep.subr.mxu0 0.0
    %1804 = vmatpush1.msra.mxu0 %v1778
    %1805 = vmatprep.subr.mxu0 0.0
    %1806 = vmatpush1.msra.mxu0 %v1779
    %1807 = vmatprep.subr.mxu0 0.0
    %1808 = vmatpush1.msra.mxu0 %v1780
    %1809 = vmatprep.subr.mxu0 0.0
    %1810 = vmatpush1.msra.mxu0 %v1781
    %1811 = vmatprep.subr.mxu0 0.0
    %1812 = vmatpush1.msra.mxu0 %v1782
    %1813 = vmatprep.subr.mxu0 0.0
    %1814 = vmatpush1.msra.mxu0 %v1783
    %1815 = vmatprep.subr.mxu0 0.0
    %1816 = vmatpush1.msra.mxu0 %v1784
    %1817 = vmatprep.subr.mxu0 0.0
    %1818 = vmatpush1.msra.mxu0 0.0
    %1819 = vmatprep.subr.mxu0 0.0
    %1820 = vmatpush1.msra.mxu0 0.0
    %1821 = vmatprep.subr.mxu0 0.0
    %1822 = vmatpush1.msra.mxu0 0.0
    %1823 = vmatprep.subr.mxu0 0.0
    %1824 = vmatpush1.msra.mxu0 0.0
    %1825 = vmatprep.subr.mxu0 0.0
    %1826 = vmatpush1.msra.mxu0 0.0
    %1827 = vmatprep.subr.mxu0 0.0
    %1828 = vmatpush1.msra.mxu0 0.0
    %1829 = vmatprep.subr.mxu0 0.0
    %1830 = vmatpush1.msra.mxu0 0.0
    %1831 = vmatprep.subr.mxu0 0.0
    %1832 = vmatpush1.msra.mxu0 0.0
    %1833 = vmatprep.subr.mxu0 0.0
    %1834 = vmatpush1.msra.mxu0 0.0
    %1835 = vmatprep.subr.mxu0 0.0
    %1836 = vmatpush1.msra.mxu0 0.0
    %1837 = vmatprep.subr.mxu0 0.0
    %1838 = vmatpush1.msra.mxu0 0.0
    %1839 = vmatprep.subr.mxu0 0.0
    %1840 = vmatpush1.msra.mxu0 0.0
    %1841 = vmatprep.subr.mxu0 0.0
    %1842 = vmatpush1.msra.mxu0 0.0
    %1843 = vmatprep.subr.mxu0 0.0
    %1844 = vmatpush1.msra.mxu0 0.0
    %1845 = vmatprep.subr.mxu0 0.0
    %1846 = vmatpush1.msra.mxu0 0.0
    %1847 = vmatprep.subr.mxu0 0.0
    %1848 = vmatpush1.msra.mxu0 0.0
    %1849 = vmatprep.mubr.f32.mxu0 0.0
    %1850 = vmatmul.mubr.f32.gmra.mrb[0].mxu0 %v1767
    %v1851 = vpop.f32.mrb[0].mxu0
    %v1852 = vadd.f32 0.0, %v1851
    %v1853 = vpop.f32.mrb[0].mxu0
    %1854 = vmatprep.mubr.f32.mxu0 0.0
    %1855 = vmatmul.mubr.f32.gmra.mrb[0].mxu0 %v1768
    %v1856 = vpop.f32.mrb[0].mxu0
    %v1857 = vadd.f32 0.0, %v1856
    %v1858 = vpop.f32.mrb[0].mxu0
    %1859 = vdwg.mxu0
    %v1860 = vadd.f32 %v1620, %v1852
    %v1861 = vadd.f32 %v1621, %v1857
    %1862 = vst.msk [vmem:[#allocation2] sm:$0xff] %vm38, %v1860
    %1863 = vst.msk [vmem:[#allocation2 + $0x8] sm:$0xff] %vm38, %v1861
    %v1864 = vld [vmem:[%s9] sm:$0x1]
    %v1866 = vlaneseq
    %v1867 = vshrl.u32 %v1866, 7
    %v1868 = vsub.s32 0, %v1867
    %v1869 = vrot.slane %v1864, %v1868
    %v1871 = vadd.f32 %v1860, %v1869
    %v1872 = vadd.f32 %v1861, %v1869
    %vm1873 = vcmask 261127
    %1874 = vst.msk [vmem:[#allocation2] sm:$0x80] %vm1873, %v1871
    %1875 = vst.msk [vmem:[#allocation2 + $0x8] sm:$0x80] %vm1873, %v1872
    // Predicated region
    $region42: #{tpu_custom_call.1} parent=1 // pred_check
      _
    $region43: #{tpu_custom_call.1} parent=1 // pred_check_branch
      %1877 = sbr.rel (0) target = $region45
    $region44: #{tpu_custom_call.1} parent=1 // pred_region
      %s1879 = ssub.s32 256, 256
      %1880 = vsyncadd [#allocation3], %s1879
      %s1881 = sshll.u32 [#allocation2], 4
      %s1882 = int_to_ptr.vmem [resolvable:$true] %s1881
      %1887 = dma.vmem_to_hbm [thread:$0]  %s1882, 256, %s10, [#allocation3], 128, 128, 8
    $region45: #{tpu_custom_call.1} parent=1 // pred_fallthru
      _
    // Predicated region
    $region46: #{tpu_custom_call.1} parent=1 // pred_check
      _
    $region47: #{tpu_custom_call.1} parent=1 // pred_check_branch
      %1889 = sbr.rel (0) target = $region49
    $region48: #{tpu_custom_call.1} parent=1 // pred_region
      %1890 = dma.done [#allocation3], 256
    $region49: #{tpu_custom_call.1} parent=1 // pred_fallthru
      _
    %1891 = vsyncpa [#allocation3], 1

</llo_original>
